<compile_context>
chip_gen: v5e
topology: v5e:2x2
jax: 0.10.0
libtpu: 0.0.40
codegen_flags: <defaults>
</compile_context>

<pallas_src>
import functools

import jax
import jax.numpy as jnp
from jax.experimental import pallas as pl
from jax.experimental.pallas import tpu as pltpu


def _round_up(n, m):
    return ((n + m - 1) // m) * m


def actor_kernel(x_ref, wih_ref, whh_ref, b_ref,
                 w1_ref, b1_ref, w2_ref, b2_ref, wa_ref, ba_ref,
                 out_ref, *, T, Bp, Hp, max_action):
    # ---- hoisted input projection for ALL timesteps at once -------------------
    # x_ref: (T*Bp, D), wih_ref: (D, 4*Hp), b_ref: (1, 4*Hp)
    gx = (jnp.dot(x_ref[...], wih_ref[...], preferred_element_type=jnp.float32)
          + b_ref[...])                                   # (T*Bp, 4*Hp)

    whh = whh_ref[...]                                    # (Hp, 4*Hp), load once

    h = jnp.zeros((Bp, Hp), jnp.float32)
    c = jnp.zeros((Bp, Hp), jnp.float32)

    # ---- statically unrolled recurrence (T is small & static) -----------------
    for t in range(T):
        # sublane-tile-aligned static slice of the precomputed x-path gates
        gates = gx[t * Bp:(t + 1) * Bp, :] + jnp.dot(
            h, whh, preferred_element_type=jnp.float32)   # (Bp, 4*Hp)

        # PyTorch gate order: input, forget, cell(g), output.
        # Hp = 128 -> each slice is a whole 128-lane block (pure VPU/EUP work).
        i_g = jax.nn.sigmoid(gates[:, 0 * Hp:1 * Hp])
        f_g = jax.nn.sigmoid(gates[:, 1 * Hp:2 * Hp])
        g_g = jnp.tanh(gates[:, 2 * Hp:3 * Hp])
        o_g = jax.nn.sigmoid(gates[:, 3 * Hp:4 * Hp])

        c = f_g * c + i_g * g_g
        h = o_g * jnp.tanh(c)

    # ---- MLP head on the final hidden state only (== actions[:, -1, :]) -------
    z1 = jnp.maximum(
        jnp.dot(h, w1_ref[...], preferred_element_type=jnp.float32) + b1_ref[...],
        0.0)
    z2 = jnp.maximum(
        jnp.dot(z1, w2_ref[...], preferred_element_type=jnp.float32) + b2_ref[...],
        0.0)
    a = jnp.tanh(
        jnp.dot(z2, wa_ref[...], preferred_element_type=jnp.float32) + ba_ref[...])
    out_ref[...] = (max_action * a).astype(out_ref.dtype)


def _pad_gate_cols(w, H, Hp):
    """Zero-pad each of the 4 gate column blocks from H to Hp columns."""
    parts = [jnp.pad(w[:, k * H:(k + 1) * H], ((0, 0), (0, Hp - H)))
             for k in range(4)]
    return jnp.concatenate(parts, axis=1)


def actor_forward(x, params, max_action):
    """x: (B, T, D_obs) float32, batch_first — same as the PyTorch module."""
    wih_t, whh_t, b_lstm, w1_t, b1, w2_t, b2, wa_t, ba = params
    B, T, D = x.shape
    H = whh_t.shape[0]
    A = wa_t.shape[1]

    Bp = _round_up(max(B, 8), 8)       # full sublane tile
    Hp = _round_up(max(H, 128), 128)   # full lane tile per gate

    # --- pad / reshape inputs and weights (zero padding keeps padded lanes 0) ---
    x_p = jnp.pad(jnp.transpose(x, (1, 0, 2)),                 # (T, B, D)
                  ((0, 0), (0, Bp - B), (0, 0)))               # (T, Bp, D)
    x_p = x_p.reshape(T * Bp, D)                               # time-major, flat

    wih_p = _pad_gate_cols(wih_t, H, Hp)                       # (D, 4*Hp)
    whh_p = jnp.pad(_pad_gate_cols(whh_t, H, Hp),
                    ((0, Hp - H), (0, 0)))                     # (Hp, 4*Hp)
    b_p = _pad_gate_cols(b_lstm, H, Hp)                        # (1, 4*Hp)
    w1_p = jnp.pad(w1_t, ((0, Hp - H), (0, 0)))                # (Hp, H)

    kernel = functools.partial(actor_kernel, T=T, Bp=Bp, Hp=Hp,
                               max_action=float(max_action))

    vmem = pl.BlockSpec(memory_space=pltpu.MemorySpace.VMEM)
    out_pad = pl.pallas_call(
        kernel,
        out_shape=jax.ShapeDtypeStruct((Bp, A), jnp.float32),
        in_specs=[vmem] * 10,
        out_specs=vmem,
    )(x_p, wih_p, whh_p, b_p, w1_p, b1, w2_t, b2, wa_t, ba)

    return out_pad[:B]


def reference_forward(x, params, max_action):
    """Plain-JAX reference matching torch.nn.LSTM / Linear semantics."""
    wih_t, whh_t, b_lstm, w1_t, b1, w2_t, b2, wa_t, ba = params
    B, T, D = x.shape
    H = whh_t.shape[0]

    def step(carry, x_t):
        h, c = carry
        gates = x_t @ wih_t + h @ whh_t + b_lstm[0]
        i = jax.nn.sigmoid(gates[:, 0 * H:1 * H])
        f = jax.nn.sigmoid(gates[:, 1 * H:2 * H])
        g = jnp.tanh(gates[:, 2 * H:3 * H])
        o = jax.nn.sigmoid(gates[:, 3 * H:4 * H])
        c_new = f * c + i * g
        h_new = o * jnp.tanh(c_new)
        return (h_new, c_new), h_new

    h0 = jnp.zeros((B, H), jnp.float32)
    c0 = jnp.zeros((B, H), jnp.float32)
    (_, _), hs = jax.lax.scan(step, (h0, c0), jnp.transpose(x, (1, 0, 2)))
    h_last = hs[-1]                                   # == seq[:, -1, :]
    z1 = jax.nn.relu(h_last @ w1_t + b1[0])
    z2 = jax.nn.relu(z1 @ w2_t + b2[0])
    return max_action * jnp.tanh(z2 @ wa_t + ba[0])


def init_params(key, obs_dim, hidden_dim, action_dim):
    """Deterministic synthetic parameters (PyTorch shapes, stored transposed)."""
    ks = jax.random.split(key, 10)
    s = 1.0 / jnp.sqrt(hidden_dim)
    u = lambda k, shape: jax.random.uniform(k, shape, jnp.float32, -s, s)

    # nn.LSTM: weight_ih (4H, D), weight_hh (4H, H), biases (4H,)
    wih_t = u(ks[0], (obs_dim, 4 * hidden_dim))
    whh_t = u(ks[1], (hidden_dim, 4 * hidden_dim))
    b_lstm = (u(ks[2], (1, 4 * hidden_dim)) + u(ks[3], (1, 4 * hidden_dim)))
    # nn.Linear: weight (out, in) -> stored as (in, out)
    w1_t = u(ks[4], (hidden_dim, hidden_dim))
    b1 = u(ks[5], (1, hidden_dim))
    w2_t = u(ks[6], (hidden_dim, 64))
    b2 = u(ks[7], (1, 64))
    wa_t = u(ks[8], (64, action_dim))
    ba = u(ks[9], (1, action_dim))
    return (wih_t, whh_t, b_lstm, w1_t, b1, w2_t, b2, wa_t, ba)


if __name__ == "__main__":
    B, T, OBS, HID, ACT = 2, 8, 10, 32, 5
    MAX_ACTION = 2.0

    key = jax.random.PRNGKey(0)
    kx, kp = jax.random.split(key)
    x = jax.random.normal(kx, (B, T, OBS), jnp.float32)
    params = init_params(kp, OBS, HID, ACT)

    out = actor_forward(x, params, MAX_ACTION)
    out = jax.block_until_ready(out)

    ref = reference_forward(x, params, MAX_ACTION)
    assert out.shape == (B, ACT), out.shape
    assert jnp.allclose(out, ref, atol=1e-4, rtol=1e-4), (out, ref)

    print("KERNEL_OK")
</pallas_src>

<mosaic_0001>
module attributes {stable_mosaic.version = 11 : i64} {
  func.func @actor_kernel(%arg0: memref<64x10xf32, #tpu.memory_space<vmem>>, %arg1: memref<10x512xf32, #tpu.memory_space<vmem>>, %arg2: memref<128x512xf32, #tpu.memory_space<vmem>>, %arg3: memref<1x512xf32, #tpu.memory_space<vmem>>, %arg4: memref<128x32xf32, #tpu.memory_space<vmem>>, %arg5: memref<1x32xf32, #tpu.memory_space<vmem>>, %arg6: memref<32x64xf32, #tpu.memory_space<vmem>>, %arg7: memref<1x64xf32, #tpu.memory_space<vmem>>, %arg8: memref<64x5xf32, #tpu.memory_space<vmem>>, %arg9: memref<1x5xf32, #tpu.memory_space<vmem>>, %arg10: memref<8x5xf32, #tpu.memory_space<vmem>>) attributes {dimension_semantics = [], scalar_prefetch = 0 : i64, scratch_operands = 0 : i64, tpu.core_type = #tpu.core_type<tc>} {
    %c0 = arith.constant 0 : index
    %c0_0 = arith.constant 0 : index
    %0 = vector.load %arg0[%c0, %c0_0] : memref<64x10xf32, #tpu.memory_space<vmem>>, vector<64x10xf32>
    %c0_1 = arith.constant 0 : index
    %c0_2 = arith.constant 0 : index
    %1 = vector.load %arg1[%c0_1, %c0_2] : memref<10x512xf32, #tpu.memory_space<vmem>>, vector<10x512xf32>
    %cst = arith.constant dense<0.000000e+00> : vector<64x512xf32>
    %2 = tpu.matmul %0, %1, %cst {dimension_numbers = #tpu.dot_dimension_numbers<[1], [0], [0], [1], [0, 0, 1, 1], [], []>} : vector<64x10xf32>, vector<10x512xf32>, vector<64x512xf32> -> vector<64x512xf32>
    %c0_3 = arith.constant 0 : index
    %c0_4 = arith.constant 0 : index
    %3 = vector.load %arg3[%c0_3, %c0_4] : memref<1x512xf32, #tpu.memory_space<vmem>>, vector<1x512xf32>
    %4 = vector.broadcast %3 : vector<1x512xf32> to vector<64x512xf32>
    %5 = arith.addf %2, %4 : vector<64x512xf32>
    %c0_5 = arith.constant 0 : index
    %c0_6 = arith.constant 0 : index
    %6 = vector.load %arg2[%c0_5, %c0_6] : memref<128x512xf32, #tpu.memory_space<vmem>>, vector<128x512xf32>
    %cst_7 = arith.constant 0.000000e+00 : f32
    %7 = vector.broadcast %cst_7 : f32 to vector<8x128xf32>
    %cst_8 = arith.constant 0.000000e+00 : f32
    %8 = vector.broadcast %cst_8 : f32 to vector<8x128xf32>
    %9 = vector.extract_strided_slice %5 {offsets = [0, 0], sizes = [8, 512], strides = [1, 1]} : vector<64x512xf32> to vector<8x512xf32>
    %cst_9 = arith.constant dense<0.000000e+00> : vector<8x512xf32>
    %10 = tpu.matmul %7, %6, %cst_9 {dimension_numbers = #tpu.dot_dimension_numbers<[1], [0], [0], [1], [0, 0, 1, 1], [], []>} : vector<8x128xf32>, vector<128x512xf32>, vector<8x512xf32> -> vector<8x512xf32>
    %11 = arith.addf %9, %10 : vector<8x512xf32>
    %12 = vector.extract_strided_slice %11 {offsets = [0, 0], sizes = [8, 128], strides = [1, 1]} : vector<8x512xf32> to vector<8x128xf32>
    %13 = arith.negf %12 : vector<8x128xf32>
    %14 = math.exp %13 : vector<8x128xf32>
    %cst_10 = arith.constant 1.000000e+00 : f32
    %15 = vector.broadcast %cst_10 : f32 to vector<8x128xf32>
    %16 = arith.addf %15, %14 : vector<8x128xf32>
    %17 = arith.divf %15, %16 : vector<8x128xf32>
    %18 = vector.extract_strided_slice %11 {offsets = [0, 128], sizes = [8, 128], strides = [1, 1]} : vector<8x512xf32> to vector<8x128xf32>
    %19 = arith.negf %18 : vector<8x128xf32>
    %20 = math.exp %19 : vector<8x128xf32>
    %cst_11 = arith.constant 1.000000e+00 : f32
    %21 = vector.broadcast %cst_11 : f32 to vector<8x128xf32>
    %22 = arith.addf %21, %20 : vector<8x128xf32>
    %23 = arith.divf %21, %22 : vector<8x128xf32>
    %24 = vector.extract_strided_slice %11 {offsets = [0, 256], sizes = [8, 128], strides = [1, 1]} : vector<8x512xf32> to vector<8x128xf32>
    %25 = math.tanh %24 : vector<8x128xf32>
    %26 = vector.extract_strided_slice %11 {offsets = [0, 384], sizes = [8, 128], strides = [1, 1]} : vector<8x512xf32> to vector<8x128xf32>
    %27 = arith.negf %26 : vector<8x128xf32>
    %28 = math.exp %27 : vector<8x128xf32>
    %cst_12 = arith.constant 1.000000e+00 : f32
    %29 = vector.broadcast %cst_12 : f32 to vector<8x128xf32>
    %30 = arith.addf %29, %28 : vector<8x128xf32>
    %31 = arith.divf %29, %30 : vector<8x128xf32>
    %32 = arith.mulf %23, %8 : vector<8x128xf32>
    %33 = arith.mulf %17, %25 : vector<8x128xf32>
    %34 = arith.addf %32, %33 : vector<8x128xf32>
    %35 = math.tanh %34 : vector<8x128xf32>
    %36 = arith.mulf %31, %35 : vector<8x128xf32>
    %37 = vector.extract_strided_slice %5 {offsets = [8, 0], sizes = [8, 512], strides = [1, 1]} : vector<64x512xf32> to vector<8x512xf32>
    %cst_13 = arith.constant dense<0.000000e+00> : vector<8x512xf32>
    %38 = tpu.matmul %36, %6, %cst_13 {dimension_numbers = #tpu.dot_dimension_numbers<[1], [0], [0], [1], [0, 0, 1, 1], [], []>} : vector<8x128xf32>, vector<128x512xf32>, vector<8x512xf32> -> vector<8x512xf32>
    %39 = arith.addf %37, %38 : vector<8x512xf32>
    %40 = vector.extract_strided_slice %39 {offsets = [0, 0], sizes = [8, 128], strides = [1, 1]} : vector<8x512xf32> to vector<8x128xf32>
    %41 = arith.negf %40 : vector<8x128xf32>
    %42 = math.exp %41 : vector<8x128xf32>
    %cst_14 = arith.constant 1.000000e+00 : f32
    %43 = vector.broadcast %cst_14 : f32 to vector<8x128xf32>
    %44 = arith.addf %43, %42 : vector<8x128xf32>
    %45 = arith.divf %43, %44 : vector<8x128xf32>
    %46 = vector.extract_strided_slice %39 {offsets = [0, 128], sizes = [8, 128], strides = [1, 1]} : vector<8x512xf32> to vector<8x128xf32>
    %47 = arith.negf %46 : vector<8x128xf32>
    %48 = math.exp %47 : vector<8x128xf32>
    %cst_15 = arith.constant 1.000000e+00 : f32
    %49 = vector.broadcast %cst_15 : f32 to vector<8x128xf32>
    %50 = arith.addf %49, %48 : vector<8x128xf32>
    %51 = arith.divf %49, %50 : vector<8x128xf32>
    %52 = vector.extract_strided_slice %39 {offsets = [0, 256], sizes = [8, 128], strides = [1, 1]} : vector<8x512xf32> to vector<8x128xf32>
    %53 = math.tanh %52 : vector<8x128xf32>
    %54 = vector.extract_strided_slice %39 {offsets = [0, 384], sizes = [8, 128], strides = [1, 1]} : vector<8x512xf32> to vector<8x128xf32>
    %55 = arith.negf %54 : vector<8x128xf32>
    %56 = math.exp %55 : vector<8x128xf32>
    %cst_16 = arith.constant 1.000000e+00 : f32
    %57 = vector.broadcast %cst_16 : f32 to vector<8x128xf32>
    %58 = arith.addf %57, %56 : vector<8x128xf32>
    %59 = arith.divf %57, %58 : vector<8x128xf32>
    %60 = arith.mulf %51, %34 : vector<8x128xf32>
    %61 = arith.mulf %45, %53 : vector<8x128xf32>
    %62 = arith.addf %60, %61 : vector<8x128xf32>
    %63 = math.tanh %62 : vector<8x128xf32>
    %64 = arith.mulf %59, %63 : vector<8x128xf32>
    %65 = vector.extract_strided_slice %5 {offsets = [16, 0], sizes = [8, 512], strides = [1, 1]} : vector<64x512xf32> to vector<8x512xf32>
    %cst_17 = arith.constant dense<0.000000e+00> : vector<8x512xf32>
    %66 = tpu.matmul %64, %6, %cst_17 {dimension_numbers = #tpu.dot_dimension_numbers<[1], [0], [0], [1], [0, 0, 1, 1], [], []>} : vector<8x128xf32>, vector<128x512xf32>, vector<8x512xf32> -> vector<8x512xf32>
    %67 = arith.addf %65, %66 : vector<8x512xf32>
    %68 = vector.extract_strided_slice %67 {offsets = [0, 0], sizes = [8, 128], strides = [1, 1]} : vector<8x512xf32> to vector<8x128xf32>
    %69 = arith.negf %68 : vector<8x128xf32>
    %70 = math.exp %69 : vector<8x128xf32>
    %cst_18 = arith.constant 1.000000e+00 : f32
    %71 = vector.broadcast %cst_18 : f32 to vector<8x128xf32>
    %72 = arith.addf %71, %70 : vector<8x128xf32>
    %73 = arith.divf %71, %72 : vector<8x128xf32>
    %74 = vector.extract_strided_slice %67 {offsets = [0, 128], sizes = [8, 128], strides = [1, 1]} : vector<8x512xf32> to vector<8x128xf32>
    %75 = arith.negf %74 : vector<8x128xf32>
    %76 = math.exp %75 : vector<8x128xf32>
    %cst_19 = arith.constant 1.000000e+00 : f32
    %77 = vector.broadcast %cst_19 : f32 to vector<8x128xf32>
    %78 = arith.addf %77, %76 : vector<8x128xf32>
    %79 = arith.divf %77, %78 : vector<8x128xf32>
    %80 = vector.extract_strided_slice %67 {offsets = [0, 256], sizes = [8, 128], strides = [1, 1]} : vector<8x512xf32> to vector<8x128xf32>
    %81 = math.tanh %80 : vector<8x128xf32>
    %82 = vector.extract_strided_slice %67 {offsets = [0, 384], sizes = [8, 128], strides = [1, 1]} : vector<8x512xf32> to vector<8x128xf32>
    %83 = arith.negf %82 : vector<8x128xf32>
    %84 = math.exp %83 : vector<8x128xf32>
    %cst_20 = arith.constant 1.000000e+00 : f32
    %85 = vector.broadcast %cst_20 : f32 to vector<8x128xf32>
    %86 = arith.addf %85, %84 : vector<8x128xf32>
    %87 = arith.divf %85, %86 : vector<8x128xf32>
    %88 = arith.mulf %79, %62 : vector<8x128xf32>
    %89 = arith.mulf %73, %81 : vector<8x128xf32>
    %90 = arith.addf %88, %89 : vector<8x128xf32>
    %91 = math.tanh %90 : vector<8x128xf32>
    %92 = arith.mulf %87, %91 : vector<8x128xf32>
    %93 = vector.extract_strided_slice %5 {offsets = [24, 0], sizes = [8, 512], strides = [1, 1]} : vector<64x512xf32> to vector<8x512xf32>
    %cst_21 = arith.constant dense<0.000000e+00> : vector<8x512xf32>
    %94 = tpu.matmul %92, %6, %cst_21 {dimension_numbers = #tpu.dot_dimension_numbers<[1], [0], [0], [1], [0, 0, 1, 1], [], []>} : vector<8x128xf32>, vector<128x512xf32>, vector<8x512xf32> -> vector<8x512xf32>
    %95 = arith.addf %93, %94 : vector<8x512xf32>
    %96 = vector.extract_strided_slice %95 {offsets = [0, 0], sizes = [8, 128], strides = [1, 1]} : vector<8x512xf32> to vector<8x128xf32>
    %97 = arith.negf %96 : vector<8x128xf32>
    %98 = math.exp %97 : vector<8x128xf32>
    %cst_22 = arith.constant 1.000000e+00 : f32
    %99 = vector.broadcast %cst_22 : f32 to vector<8x128xf32>
    %100 = arith.addf %99, %98 : vector<8x128xf32>
    %101 = arith.divf %99, %100 : vector<8x128xf32>
    %102 = vector.extract_strided_slice %95 {offsets = [0, 128], sizes = [8, 128], strides = [1, 1]} : vector<8x512xf32> to vector<8x128xf32>
    %103 = arith.negf %102 : vector<8x128xf32>
    %104 = math.exp %103 : vector<8x128xf32>
    %cst_23 = arith.constant 1.000000e+00 : f32
    %105 = vector.broadcast %cst_23 : f32 to vector<8x128xf32>
    %106 = arith.addf %105, %104 : vector<8x128xf32>
    %107 = arith.divf %105, %106 : vector<8x128xf32>
    %108 = vector.extract_strided_slice %95 {offsets = [0, 256], sizes = [8, 128], strides = [1, 1]} : vector<8x512xf32> to vector<8x128xf32>
    %109 = math.tanh %108 : vector<8x128xf32>
    %110 = vector.extract_strided_slice %95 {offsets = [0, 384], sizes = [8, 128], strides = [1, 1]} : vector<8x512xf32> to vector<8x128xf32>
    %111 = arith.negf %110 : vector<8x128xf32>
    %112 = math.exp %111 : vector<8x128xf32>
    %cst_24 = arith.constant 1.000000e+00 : f32
    %113 = vector.broadcast %cst_24 : f32 to vector<8x128xf32>
    %114 = arith.addf %113, %112 : vector<8x128xf32>
    %115 = arith.divf %113, %114 : vector<8x128xf32>
    %116 = arith.mulf %107, %90 : vector<8x128xf32>
    %117 = arith.mulf %101, %109 : vector<8x128xf32>
    %118 = arith.addf %116, %117 : vector<8x128xf32>
    %119 = math.tanh %118 : vector<8x128xf32>
    %120 = arith.mulf %115, %119 : vector<8x128xf32>
    %121 = vector.extract_strided_slice %5 {offsets = [32, 0], sizes = [8, 512], strides = [1, 1]} : vector<64x512xf32> to vector<8x512xf32>
    %cst_25 = arith.constant dense<0.000000e+00> : vector<8x512xf32>
    %122 = tpu.matmul %120, %6, %cst_25 {dimension_numbers = #tpu.dot_dimension_numbers<[1], [0], [0], [1], [0, 0, 1, 1], [], []>} : vector<8x128xf32>, vector<128x512xf32>, vector<8x512xf32> -> vector<8x512xf32>
    %123 = arith.addf %121, %122 : vector<8x512xf32>
    %124 = vector.extract_strided_slice %123 {offsets = [0, 0], sizes = [8, 128], strides = [1, 1]} : vector<8x512xf32> to vector<8x128xf32>
    %125 = arith.negf %124 : vector<8x128xf32>
    %126 = math.exp %125 : vector<8x128xf32>
    %cst_26 = arith.constant 1.000000e+00 : f32
    %127 = vector.broadcast %cst_26 : f32 to vector<8x128xf32>
    %128 = arith.addf %127, %126 : vector<8x128xf32>
    %129 = arith.divf %127, %128 : vector<8x128xf32>
    %130 = vector.extract_strided_slice %123 {offsets = [0, 128], sizes = [8, 128], strides = [1, 1]} : vector<8x512xf32> to vector<8x128xf32>
    %131 = arith.negf %130 : vector<8x128xf32>
    %132 = math.exp %131 : vector<8x128xf32>
    %cst_27 = arith.constant 1.000000e+00 : f32
    %133 = vector.broadcast %cst_27 : f32 to vector<8x128xf32>
    %134 = arith.addf %133, %132 : vector<8x128xf32>
    %135 = arith.divf %133, %134 : vector<8x128xf32>
    %136 = vector.extract_strided_slice %123 {offsets = [0, 256], sizes = [8, 128], strides = [1, 1]} : vector<8x512xf32> to vector<8x128xf32>
    %137 = math.tanh %136 : vector<8x128xf32>
    %138 = vector.extract_strided_slice %123 {offsets = [0, 384], sizes = [8, 128], strides = [1, 1]} : vector<8x512xf32> to vector<8x128xf32>
    %139 = arith.negf %138 : vector<8x128xf32>
    %140 = math.exp %139 : vector<8x128xf32>
    %cst_28 = arith.constant 1.000000e+00 : f32
    %141 = vector.broadcast %cst_28 : f32 to vector<8x128xf32>
    %142 = arith.addf %141, %140 : vector<8x128xf32>
    %143 = arith.divf %141, %142 : vector<8x128xf32>
    %144 = arith.mulf %135, %118 : vector<8x128xf32>
    %145 = arith.mulf %129, %137 : vector<8x128xf32>
    %146 = arith.addf %144, %145 : vector<8x128xf32>
    %147 = math.tanh %146 : vector<8x128xf32>
    %148 = arith.mulf %143, %147 : vector<8x128xf32>
    %149 = vector.extract_strided_slice %5 {offsets = [40, 0], sizes = [8, 512], strides = [1, 1]} : vector<64x512xf32> to vector<8x512xf32>
    %cst_29 = arith.constant dense<0.000000e+00> : vector<8x512xf32>
    %150 = tpu.matmul %148, %6, %cst_29 {dimension_numbers = #tpu.dot_dimension_numbers<[1], [0], [0], [1], [0, 0, 1, 1], [], []>} : vector<8x128xf32>, vector<128x512xf32>, vector<8x512xf32> -> vector<8x512xf32>
    %151 = arith.addf %149, %150 : vector<8x512xf32>
    %152 = vector.extract_strided_slice %151 {offsets = [0, 0], sizes = [8, 128], strides = [1, 1]} : vector<8x512xf32> to vector<8x128xf32>
    %153 = arith.negf %152 : vector<8x128xf32>
    %154 = math.exp %153 : vector<8x128xf32>
    %cst_30 = arith.constant 1.000000e+00 : f32
    %155 = vector.broadcast %cst_30 : f32 to vector<8x128xf32>
    %156 = arith.addf %155, %154 : vector<8x128xf32>
    %157 = arith.divf %155, %156 : vector<8x128xf32>
    %158 = vector.extract_strided_slice %151 {offsets = [0, 128], sizes = [8, 128], strides = [1, 1]} : vector<8x512xf32> to vector<8x128xf32>
    %159 = arith.negf %158 : vector<8x128xf32>
    %160 = math.exp %159 : vector<8x128xf32>
    %cst_31 = arith.constant 1.000000e+00 : f32
    %161 = vector.broadcast %cst_31 : f32 to vector<8x128xf32>
    %162 = arith.addf %161, %160 : vector<8x128xf32>
    %163 = arith.divf %161, %162 : vector<8x128xf32>
    %164 = vector.extract_strided_slice %151 {offsets = [0, 256], sizes = [8, 128], strides = [1, 1]} : vector<8x512xf32> to vector<8x128xf32>
    %165 = math.tanh %164 : vector<8x128xf32>
    %166 = vector.extract_strided_slice %151 {offsets = [0, 384], sizes = [8, 128], strides = [1, 1]} : vector<8x512xf32> to vector<8x128xf32>
    %167 = arith.negf %166 : vector<8x128xf32>
    %168 = math.exp %167 : vector<8x128xf32>
    %cst_32 = arith.constant 1.000000e+00 : f32
    %169 = vector.broadcast %cst_32 : f32 to vector<8x128xf32>
    %170 = arith.addf %169, %168 : vector<8x128xf32>
    %171 = arith.divf %169, %170 : vector<8x128xf32>
    %172 = arith.mulf %163, %146 : vector<8x128xf32>
    %173 = arith.mulf %157, %165 : vector<8x128xf32>
    %174 = arith.addf %172, %173 : vector<8x128xf32>
    %175 = math.tanh %174 : vector<8x128xf32>
    %176 = arith.mulf %171, %175 : vector<8x128xf32>
    %177 = vector.extract_strided_slice %5 {offsets = [48, 0], sizes = [8, 512], strides = [1, 1]} : vector<64x512xf32> to vector<8x512xf32>
    %cst_33 = arith.constant dense<0.000000e+00> : vector<8x512xf32>
    %178 = tpu.matmul %176, %6, %cst_33 {dimension_numbers = #tpu.dot_dimension_numbers<[1], [0], [0], [1], [0, 0, 1, 1], [], []>} : vector<8x128xf32>, vector<128x512xf32>, vector<8x512xf32> -> vector<8x512xf32>
    %179 = arith.addf %177, %178 : vector<8x512xf32>
    %180 = vector.extract_strided_slice %179 {offsets = [0, 0], sizes = [8, 128], strides = [1, 1]} : vector<8x512xf32> to vector<8x128xf32>
    %181 = arith.negf %180 : vector<8x128xf32>
    %182 = math.exp %181 : vector<8x128xf32>
    %cst_34 = arith.constant 1.000000e+00 : f32
    %183 = vector.broadcast %cst_34 : f32 to vector<8x128xf32>
    %184 = arith.addf %183, %182 : vector<8x128xf32>
    %185 = arith.divf %183, %184 : vector<8x128xf32>
    %186 = vector.extract_strided_slice %179 {offsets = [0, 128], sizes = [8, 128], strides = [1, 1]} : vector<8x512xf32> to vector<8x128xf32>
    %187 = arith.negf %186 : vector<8x128xf32>
    %188 = math.exp %187 : vector<8x128xf32>
    %cst_35 = arith.constant 1.000000e+00 : f32
    %189 = vector.broadcast %cst_35 : f32 to vector<8x128xf32>
    %190 = arith.addf %189, %188 : vector<8x128xf32>
    %191 = arith.divf %189, %190 : vector<8x128xf32>
    %192 = vector.extract_strided_slice %179 {offsets = [0, 256], sizes = [8, 128], strides = [1, 1]} : vector<8x512xf32> to vector<8x128xf32>
    %193 = math.tanh %192 : vector<8x128xf32>
    %194 = vector.extract_strided_slice %179 {offsets = [0, 384], sizes = [8, 128], strides = [1, 1]} : vector<8x512xf32> to vector<8x128xf32>
    %195 = arith.negf %194 : vector<8x128xf32>
    %196 = math.exp %195 : vector<8x128xf32>
    %cst_36 = arith.constant 1.000000e+00 : f32
    %197 = vector.broadcast %cst_36 : f32 to vector<8x128xf32>
    %198 = arith.addf %197, %196 : vector<8x128xf32>
    %199 = arith.divf %197, %198 : vector<8x128xf32>
    %200 = arith.mulf %191, %174 : vector<8x128xf32>
    %201 = arith.mulf %185, %193 : vector<8x128xf32>
    %202 = arith.addf %200, %201 : vector<8x128xf32>
    %203 = math.tanh %202 : vector<8x128xf32>
    %204 = arith.mulf %199, %203 : vector<8x128xf32>
    %205 = vector.extract_strided_slice %5 {offsets = [56, 0], sizes = [8, 512], strides = [1, 1]} : vector<64x512xf32> to vector<8x512xf32>
    %cst_37 = arith.constant dense<0.000000e+00> : vector<8x512xf32>
    %206 = tpu.matmul %204, %6, %cst_37 {dimension_numbers = #tpu.dot_dimension_numbers<[1], [0], [0], [1], [0, 0, 1, 1], [], []>} : vector<8x128xf32>, vector<128x512xf32>, vector<8x512xf32> -> vector<8x512xf32>
    %207 = arith.addf %205, %206 : vector<8x512xf32>
    %208 = vector.extract_strided_slice %207 {offsets = [0, 0], sizes = [8, 128], strides = [1, 1]} : vector<8x512xf32> to vector<8x128xf32>
    %209 = arith.negf %208 : vector<8x128xf32>
    %210 = math.exp %209 : vector<8x128xf32>
    %cst_38 = arith.constant 1.000000e+00 : f32
    %211 = vector.broadcast %cst_38 : f32 to vector<8x128xf32>
    %212 = arith.addf %211, %210 : vector<8x128xf32>
    %213 = arith.divf %211, %212 : vector<8x128xf32>
    %214 = vector.extract_strided_slice %207 {offsets = [0, 128], sizes = [8, 128], strides = [1, 1]} : vector<8x512xf32> to vector<8x128xf32>
    %215 = arith.negf %214 : vector<8x128xf32>
    %216 = math.exp %215 : vector<8x128xf32>
    %cst_39 = arith.constant 1.000000e+00 : f32
    %217 = vector.broadcast %cst_39 : f32 to vector<8x128xf32>
    %218 = arith.addf %217, %216 : vector<8x128xf32>
    %219 = arith.divf %217, %218 : vector<8x128xf32>
    %220 = vector.extract_strided_slice %207 {offsets = [0, 256], sizes = [8, 128], strides = [1, 1]} : vector<8x512xf32> to vector<8x128xf32>
    %221 = math.tanh %220 : vector<8x128xf32>
    %222 = vector.extract_strided_slice %207 {offsets = [0, 384], sizes = [8, 128], strides = [1, 1]} : vector<8x512xf32> to vector<8x128xf32>
    %223 = arith.negf %222 : vector<8x128xf32>
    %224 = math.exp %223 : vector<8x128xf32>
    %cst_40 = arith.constant 1.000000e+00 : f32
    %225 = vector.broadcast %cst_40 : f32 to vector<8x128xf32>
    %226 = arith.addf %225, %224 : vector<8x128xf32>
    %227 = arith.divf %225, %226 : vector<8x128xf32>
    %228 = arith.mulf %219, %202 : vector<8x128xf32>
    %229 = arith.mulf %213, %221 : vector<8x128xf32>
    %230 = arith.addf %228, %229 : vector<8x128xf32>
    %231 = math.tanh %230 : vector<8x128xf32>
    %232 = arith.mulf %227, %231 : vector<8x128xf32>
    %c0_41 = arith.constant 0 : index
    %c0_42 = arith.constant 0 : index
    %233 = vector.load %arg4[%c0_41, %c0_42] : memref<128x32xf32, #tpu.memory_space<vmem>>, vector<128x32xf32>
    %cst_43 = arith.constant dense<0.000000e+00> : vector<8x32xf32>
    %234 = tpu.matmul %232, %233, %cst_43 {dimension_numbers = #tpu.dot_dimension_numbers<[1], [0], [0], [1], [0, 0, 1, 1], [], []>} : vector<8x128xf32>, vector<128x32xf32>, vector<8x32xf32> -> vector<8x32xf32>
    %c0_44 = arith.constant 0 : index
    %c0_45 = arith.constant 0 : index
    %235 = vector.load %arg5[%c0_44, %c0_45] : memref<1x32xf32, #tpu.memory_space<vmem>>, vector<1x32xf32>
    %236 = vector.broadcast %235 : vector<1x32xf32> to vector<8x32xf32>
    %237 = arith.addf %234, %236 : vector<8x32xf32>
    %cst_46 = arith.constant 0.000000e+00 : f32
    %238 = vector.broadcast %cst_46 : f32 to vector<8x32xf32>
    %239 = arith.maximumf %237, %238 : vector<8x32xf32>
    %c0_47 = arith.constant 0 : index
    %c0_48 = arith.constant 0 : index
    %240 = vector.load %arg6[%c0_47, %c0_48] : memref<32x64xf32, #tpu.memory_space<vmem>>, vector<32x64xf32>
    %cst_49 = arith.constant dense<0.000000e+00> : vector<8x64xf32>
    %241 = tpu.matmul %239, %240, %cst_49 {dimension_numbers = #tpu.dot_dimension_numbers<[1], [0], [0], [1], [0, 0, 1, 1], [], []>} : vector<8x32xf32>, vector<32x64xf32>, vector<8x64xf32> -> vector<8x64xf32>
    %c0_50 = arith.constant 0 : index
    %c0_51 = arith.constant 0 : index
    %242 = vector.load %arg7[%c0_50, %c0_51] : memref<1x64xf32, #tpu.memory_space<vmem>>, vector<1x64xf32>
    %243 = vector.broadcast %242 : vector<1x64xf32> to vector<8x64xf32>
    %244 = arith.addf %241, %243 : vector<8x64xf32>
    %cst_52 = arith.constant 0.000000e+00 : f32
    %245 = vector.broadcast %cst_52 : f32 to vector<8x64xf32>
    %246 = arith.maximumf %244, %245 : vector<8x64xf32>
    %c0_53 = arith.constant 0 : index
    %c0_54 = arith.constant 0 : index
    %247 = vector.load %arg8[%c0_53, %c0_54] : memref<64x5xf32, #tpu.memory_space<vmem>>, vector<64x5xf32>
    %cst_55 = arith.constant dense<0.000000e+00> : vector<8x5xf32>
    %248 = tpu.matmul %246, %247, %cst_55 {dimension_numbers = #tpu.dot_dimension_numbers<[1], [0], [0], [1], [0, 0, 1, 1], [], []>} : vector<8x64xf32>, vector<64x5xf32>, vector<8x5xf32> -> vector<8x5xf32>
    %c0_56 = arith.constant 0 : index
    %c0_57 = arith.constant 0 : index
    %249 = vector.load %arg9[%c0_56, %c0_57] : memref<1x5xf32, #tpu.memory_space<vmem>>, vector<1x5xf32>
    %250 = vector.broadcast %249 : vector<1x5xf32> to vector<8x5xf32>
    %251 = arith.addf %248, %250 : vector<8x5xf32>
    %252 = math.tanh %251 : vector<8x5xf32>
    %cst_58 = arith.constant 2.000000e+00 : f32
    %253 = vector.broadcast %cst_58 : f32 to vector<8x5xf32>
    %254 = arith.mulf %253, %252 : vector<8x5xf32>
    %c0_59 = arith.constant 0 : index
    %c0_60 = arith.constant 0 : index
    %255 = vector.load %arg10[%c0_59, %c0_60] : memref<8x5xf32, #tpu.memory_space<vmem>>, vector<8x5xf32>
    tpu.vector_store %arg10[%c0_59, %c0_60], %254 {strides = array<i32>} : memref<8x5xf32, #tpu.memory_space<vmem>>, vector<8x5xf32>,
    return
  }
}

</mosaic_0001>

<llo_original>
// kernel: tpu_custom_call.1
$region0: #{tpu_custom_call.1}
  #allocation0 [shape = 'u32[]', space=smem, size = 0x4, offset = 0x4, fixed_abs, tag = 'smem constant byte address 0x4 - core index']
  #allocation1 [shape = 'u32[72,128]{1,0:T(1,128)}', space=vmem, size = 0x9000, scoped, tag = 'internal scratch']
  %s0 = inlined_call_operand.vmem [shape: f32[64,10], index: 0, kind: input, shape index: {}]
  %s1 = inlined_call_operand.vmem [shape: f32[10,512], index: 1, kind: input, shape index: {}]
  %s2 = inlined_call_operand.hbm [shape: f32[128,512], index: 2, kind: input, shape index: {}]
  %s3 = inlined_call_operand.vmem [shape: f32[1,512], index: 3, kind: input, shape index: {}]
  %s4 = inlined_call_operand.vmem [shape: f32[128,32], index: 4, kind: input, shape index: {}]
  %s5 = inlined_call_operand.vmem [shape: f32[1,32], index: 5, kind: input, shape index: {}]
  %s6 = inlined_call_operand.vmem [shape: f32[32,64], index: 6, kind: input, shape index: {}]
  %s7 = inlined_call_operand.vmem [shape: f32[1,64], index: 7, kind: input, shape index: {}]
  %s8 = inlined_call_operand.vmem [shape: f32[64,5], index: 8, kind: input, shape index: {}]
  %s9 = inlined_call_operand.vmem [shape: f32[1,5], index: 9, kind: input, shape index: {}]
  %s10 = inlined_call_operand.hbm [shape: f32[8,5], index: 10, kind: output, shape index: {}]
  %s11 = sld [smem:[#allocation0]]
  $region54: #{tpu_custom_call.1} parent=0
    _
  %s13 = ssub.s32 1, %s11
  %s14 = scalar_select 0, %s13, %s11
  $region1: #{tpu_custom_call.1} parent=0
    #allocation2 [shape = 'u8[262144]{0}', space=vmem, size = 0x40000, scoped, tag = 'input window, operand 2, single buffered']
    #allocation3 [shape = 's32[1]{0}', space=sflag, size = 0x4, scoped, tag = 'scoped memory for tpu_custom_call.1']
    #allocation4 [shape = 's32[1]{0}', space=sflag, size = 0x4, scoped, tag = 'scoped memory for tpu_custom_call.1']
    #allocation5 [shape = 'u8[4096]{0}', space=vmem, size = 0x1000, scoped, tag = 'output window, operand 0, single buffered']
    %15 = vsyncpa [#allocation3], 0
    %16 = vsyncpa [#allocation4], 0
    // Predicated region
    $region2: #{tpu_custom_call.1} parent=1 // pred_check
      _
    $region3: #{tpu_custom_call.1} parent=1 // pred_check_branch
      %18 = sbr.rel (0) target = $region5
    $region4: #{tpu_custom_call.1} parent=1 // pred_region
      _
    $region5: #{tpu_custom_call.1} parent=1 // pred_fallthru
      _
    // Predicated region
    $region6: #{tpu_custom_call.1} parent=1 // pred_check
      _
    $region7: #{tpu_custom_call.1} parent=1 // pred_check_branch
      %20 = sbr.rel (0) target = $region9
    $region8: #{tpu_custom_call.1} parent=1 // pred_region
      _
    $region9: #{tpu_custom_call.1} parent=1 // pred_fallthru
      _
    // Predicated region
    $region10: #{tpu_custom_call.1} parent=1 // pred_check
      _
    $region11: #{tpu_custom_call.1} parent=1 // pred_check_branch
      %22 = sbr.rel (0) target = $region13
    $region12: #{tpu_custom_call.1} parent=1 // pred_region
      %24 = vsyncadd [#allocation3], 0
      %s25 = sshll.u32 %s2, 4
      %s26 = int_to_ptr.hbm [resolvable:$true] %s25
      %s27 = sshll.u32 [#allocation2], 4
      %s28 = int_to_ptr.vmem [resolvable:$true] %s27
      %33 = dma.hbm_to_vmem [thread:$0]  %s26, 8192, %s28, [#allocation3], 512, 512, 32
    $region13: #{tpu_custom_call.1} parent=1 // pred_fallthru
      _
    // Predicated region
    $region14: #{tpu_custom_call.1} parent=1 // pred_check
      _
    $region15: #{tpu_custom_call.1} parent=1 // pred_check_branch
      %35 = sbr.rel (0) target = $region17
    $region16: #{tpu_custom_call.1} parent=1 // pred_region
      _
    $region17: #{tpu_custom_call.1} parent=1 // pred_fallthru
      _
    // Predicated region
    $region18: #{tpu_custom_call.1} parent=1 // pred_check
      _
    $region19: #{tpu_custom_call.1} parent=1 // pred_check_branch
      %37 = sbr.rel (0) target = $region21
    $region20: #{tpu_custom_call.1} parent=1 // pred_region
      _
    $region21: #{tpu_custom_call.1} parent=1 // pred_fallthru
      _
    // Predicated region
    $region22: #{tpu_custom_call.1} parent=1 // pred_check
      _
    $region23: #{tpu_custom_call.1} parent=1 // pred_check_branch
      %39 = sbr.rel (0) target = $region25
    $region24: #{tpu_custom_call.1} parent=1 // pred_region
      _
    $region25: #{tpu_custom_call.1} parent=1 // pred_fallthru
      _
    // Predicated region
    $region26: #{tpu_custom_call.1} parent=1 // pred_check
      _
    $region27: #{tpu_custom_call.1} parent=1 // pred_check_branch
      %41 = sbr.rel (0) target = $region29
    $region28: #{tpu_custom_call.1} parent=1 // pred_region
      _
    $region29: #{tpu_custom_call.1} parent=1 // pred_fallthru
      _
    // Predicated region
    $region30: #{tpu_custom_call.1} parent=1 // pred_check
      _
    $region31: #{tpu_custom_call.1} parent=1 // pred_check_branch
      %43 = sbr.rel (0) target = $region33
    $region32: #{tpu_custom_call.1} parent=1 // pred_region
      _
    $region33: #{tpu_custom_call.1} parent=1 // pred_fallthru
      _
    // Predicated region
    $region34: #{tpu_custom_call.1} parent=1 // pred_check
      _
    $region35: #{tpu_custom_call.1} parent=1 // pred_check_branch
      %45 = sbr.rel (0) target = $region37
    $region36: #{tpu_custom_call.1} parent=1 // pred_region
      _
    $region37: #{tpu_custom_call.1} parent=1 // pred_fallthru
      _
    // Predicated region
    $region38: #{tpu_custom_call.1} parent=1 // pred_check
      _
    $region39: #{tpu_custom_call.1} parent=1 // pred_check_branch
      %47 = sbr.rel (0) target = $region41
    $region40: #{tpu_custom_call.1} parent=1 // pred_region
      _
    $region41: #{tpu_custom_call.1} parent=1 // pred_fallthru
      _
    // Predicated region
    $region42: #{tpu_custom_call.1} parent=1 // pred_check
      _
    $region43: #{tpu_custom_call.1} parent=1 // pred_check_branch
      %49 = sbr.rel (0) target = $region45
    $region44: #{tpu_custom_call.1} parent=1 // pred_region
      %51 = dma.done [#allocation3], 8192
    $region45: #{tpu_custom_call.1} parent=1 // pred_fallthru
      _
    %v52 = vld [vmem:[%s0] sm:$0xff]
    %v53 = vld [vmem:[%s0 + $0x8] sm:$0xff]
    %v54 = vld [vmem:[%s0 + $0x10] sm:$0xff]
    %v55 = vld [vmem:[%s0 + $0x18] sm:$0xff]
    %v56 = vld [vmem:[%s0 + $0x20] sm:$0xff]
    %v57 = vld [vmem:[%s0 + $0x28] sm:$0xff]
    %v58 = vld [vmem:[%s0 + $0x30] sm:$0xff]
    %v59 = vld [vmem:[%s0 + $0x38] sm:$0xff]
    %v60 = vld [vmem:[%s1] sm:$0xff]
    %v61 = vld [vmem:[%s1 + $0x8] sm:$0xff]
    %v62 = vld [vmem:[%s1 + $0x10] sm:$0xff]
    %v63 = vld [vmem:[%s1 + $0x18] sm:$0xff]
    %v64 = vld [vmem:[%s1 + $0x20] sm:$0x3]
    %v65 = vld [vmem:[%s1 + $0x28] sm:$0x3]
    %v66 = vld [vmem:[%s1 + $0x30] sm:$0x3]
    %v67 = vld [vmem:[%s1 + $0x38] sm:$0x3]
    %v68 = vld [vmem:[%s3] sm:$0xf]
    %v70 = vperm.slane %v68, 0
    %v71 = vperm.slane %v68, 1
    %v72 = vperm.slane %v68, 2
    %v73 = vperm.slane %v68, 3
    %vm78 = vcmask 80896
    %v80 = vsel %vm78, %v52, 0
    %v83 = vsel %vm78, %v53, 0
    %v86 = vsel %vm78, %v54, 0
    %v89 = vsel %vm78, %v55, 0
    %v92 = vsel %vm78, %v56, 0
    %v95 = vsel %vm78, %v57, 0
    %v98 = vsel %vm78, %v58, 0
    %v101 = vsel %vm78, %v59, 0
    %vm103 = vcmask 1041408
    %v105 = vsel %vm103, %v64, 0
    %v108 = vsel %vm103, %v65, 0
    %v111 = vsel %vm103, %v66, 0
    %v114 = vsel %vm103, %v67, 0
    %116 = vmatpush.msra.mxu0 0.0
    %117 = vmatpush.msra.mxu0 0.0
    %118 = vmatpush.msra.mxu0 0.0
    %119 = vmatpush.msra.mxu0 0.0
    %120 = vmatpush.msra.mxu0 0.0
    %121 = vmatpush.msra.mxu0 0.0
    %122 = vmatpush.msra.mxu0 0.0
    %123 = vmatpush.msra.mxu0 0.0
    %124 = vmatpush.msra.mxu0 0.0
    %125 = vmatpush.msra.mxu0 0.0
    %126 = vmatpush.msra.mxu0 0.0
    %127 = vmatpush.msra.mxu0 0.0
    %128 = vmatpush.msra.mxu0 0.0
    %129 = vmatpush.msra.mxu0 0.0
    %130 = vmatpush.msra.mxu0 %v105
    %131 = vmatpush.msra.mxu0 %v60
    %132 = vmatmul.f32.gmra.mxu0 %v80
    %v133 = vpop.f32.mrf.mxu0
    %v134 = vadd.f32 %v70, %v133
    %135 = vmatmul.f32.gmra.mxu0 %v83
    %v136 = vpop.f32.mrf.mxu0
    %v137 = vadd.f32 %v70, %v136
    %138 = vmatmul.f32.gmra.mxu0 %v86
    %v139 = vpop.f32.mrf.mxu0
    %v140 = vadd.f32 %v70, %v139
    %141 = vmatmul.f32.gmra.mxu0 %v89
    %v142 = vpop.f32.mrf.mxu0
    %v143 = vadd.f32 %v70, %v142
    %144 = vmatmul.f32.gmra.mxu0 %v92
    %v145 = vpop.f32.mrf.mxu0
    %v146 = vadd.f32 %v70, %v145
    %147 = vmatmul.f32.gmra.mxu0 %v95
    %v148 = vpop.f32.mrf.mxu0
    %v149 = vadd.f32 %v70, %v148
    %150 = vmatmul.f32.gmra.mxu0 %v98
    %v151 = vpop.f32.mrf.mxu0
    %v152 = vadd.f32 %v70, %v151
    %153 = vmatmul.f32.gmra.mxu0 %v101
    %v154 = vpop.f32.mrf.mxu0
    %v155 = vadd.f32 %v70, %v154
    %156 = vdwg.mxu0
    %157 = vmatpush.msra.mxu0 0.0
    %158 = vmatpush.msra.mxu0 0.0
    %159 = vmatpush.msra.mxu0 0.0
    %160 = vmatpush.msra.mxu0 0.0
    %161 = vmatpush.msra.mxu0 0.0
    %162 = vmatpush.msra.mxu0 0.0
    %163 = vmatpush.msra.mxu0 0.0
    %164 = vmatpush.msra.mxu0 0.0
    %165 = vmatpush.msra.mxu0 0.0
    %166 = vmatpush.msra.mxu0 0.0
    %167 = vmatpush.msra.mxu0 0.0
    %168 = vmatpush.msra.mxu0 0.0
    %169 = vmatpush.msra.mxu0 0.0
    %170 = vmatpush.msra.mxu0 0.0
    %171 = vmatpush.msra.mxu0 %v108
    %172 = vmatpush.msra.mxu0 %v61
    %173 = vmatmul.f32.gmra.mxu0 %v80
    %v174 = vpop.f32.mrf.mxu0
    %v175 = vadd.f32 %v71, %v174
    %176 = vmatmul.f32.gmra.mxu0 %v83
    %v177 = vpop.f32.mrf.mxu0
    %v178 = vadd.f32 %v71, %v177
    %179 = vmatmul.f32.gmra.mxu0 %v86
    %v180 = vpop.f32.mrf.mxu0
    %v181 = vadd.f32 %v71, %v180
    %182 = vmatmul.f32.gmra.mxu0 %v89
    %v183 = vpop.f32.mrf.mxu0
    %v184 = vadd.f32 %v71, %v183
    %185 = vmatmul.f32.gmra.mxu0 %v92
    %v186 = vpop.f32.mrf.mxu0
    %v187 = vadd.f32 %v71, %v186
    %188 = vmatmul.f32.gmra.mxu0 %v95
    %v189 = vpop.f32.mrf.mxu0
    %v190 = vadd.f32 %v71, %v189
    %191 = vmatmul.f32.gmra.mxu0 %v98
    %v192 = vpop.f32.mrf.mxu0
    %v193 = vadd.f32 %v71, %v192
    %194 = vmatmul.f32.gmra.mxu0 %v101
    %v195 = vpop.f32.mrf.mxu0
    %v196 = vadd.f32 %v71, %v195
    %197 = vdwg.mxu0
    %198 = vmatpush.msra.mxu0 0.0
    %199 = vmatpush.msra.mxu0 0.0
    %200 = vmatpush.msra.mxu0 0.0
    %201 = vmatpush.msra.mxu0 0.0
    %202 = vmatpush.msra.mxu0 0.0
    %203 = vmatpush.msra.mxu0 0.0
    %204 = vmatpush.msra.mxu0 0.0
    %205 = vmatpush.msra.mxu0 0.0
    %206 = vmatpush.msra.mxu0 0.0
    %207 = vmatpush.msra.mxu0 0.0
    %208 = vmatpush.msra.mxu0 0.0
    %209 = vmatpush.msra.mxu0 0.0
    %210 = vmatpush.msra.mxu0 0.0
    %211 = vmatpush.msra.mxu0 0.0
    %212 = vmatpush.msra.mxu0 %v111
    %213 = vmatpush.msra.mxu0 %v62
    %214 = vmatmul.f32.gmra.mxu0 %v80
    %v215 = vpop.f32.mrf.mxu0
    %v216 = vadd.f32 %v72, %v215
    %217 = vmatmul.f32.gmra.mxu0 %v83
    %v218 = vpop.f32.mrf.mxu0
    %v219 = vadd.f32 %v72, %v218
    %220 = vmatmul.f32.gmra.mxu0 %v86
    %v221 = vpop.f32.mrf.mxu0
    %v222 = vadd.f32 %v72, %v221
    %223 = vmatmul.f32.gmra.mxu0 %v89
    %v224 = vpop.f32.mrf.mxu0
    %v225 = vadd.f32 %v72, %v224
    %226 = vmatmul.f32.gmra.mxu0 %v92
    %v227 = vpop.f32.mrf.mxu0
    %v228 = vadd.f32 %v72, %v227
    %229 = vmatmul.f32.gmra.mxu0 %v95
    %v230 = vpop.f32.mrf.mxu0
    %v231 = vadd.f32 %v72, %v230
    %232 = vmatmul.f32.gmra.mxu0 %v98
    %v233 = vpop.f32.mrf.mxu0
    %v234 = vadd.f32 %v72, %v233
    %235 = vmatmul.f32.gmra.mxu0 %v101
    %v236 = vpop.f32.mrf.mxu0
    %v237 = vadd.f32 %v72, %v236
    %238 = vdwg.mxu0
    %239 = vmatpush.msra.mxu0 0.0
    %240 = vmatpush.msra.mxu0 0.0
    %241 = vmatpush.msra.mxu0 0.0
    %242 = vmatpush.msra.mxu0 0.0
    %243 = vmatpush.msra.mxu0 0.0
    %244 = vmatpush.msra.mxu0 0.0
    %245 = vmatpush.msra.mxu0 0.0
    %246 = vmatpush.msra.mxu0 0.0
    %247 = vmatpush.msra.mxu0 0.0
    %248 = vmatpush.msra.mxu0 0.0
    %249 = vmatpush.msra.mxu0 0.0
    %250 = vmatpush.msra.mxu0 0.0
    %251 = vmatpush.msra.mxu0 0.0
    %252 = vmatpush.msra.mxu0 0.0
    %253 = vmatpush.msra.mxu0 %v114
    %254 = vmatpush.msra.mxu0 %v63
    %255 = vmatmul.f32.gmra.mxu0 %v80
    %v256 = vpop.f32.mrf.mxu0
    %v257 = vadd.f32 %v73, %v256
    %258 = vmatmul.f32.gmra.mxu0 %v83
    %v259 = vpop.f32.mrf.mxu0
    %v260 = vadd.f32 %v73, %v259
    %261 = vmatmul.f32.gmra.mxu0 %v86
    %v262 = vpop.f32.mrf.mxu0
    %v263 = vadd.f32 %v73, %v262
    %264 = vmatmul.f32.gmra.mxu0 %v89
    %v265 = vpop.f32.mrf.mxu0
    %v266 = vadd.f32 %v73, %v265
    %267 = vmatmul.f32.gmra.mxu0 %v92
    %v268 = vpop.f32.mrf.mxu0
    %v269 = vadd.f32 %v73, %v268
    %270 = vmatmul.f32.gmra.mxu0 %v95
    %v271 = vpop.f32.mrf.mxu0
    %v272 = vadd.f32 %v73, %v271
    %273 = vmatmul.f32.gmra.mxu0 %v98
    %v274 = vpop.f32.mrf.mxu0
    %v275 = vadd.f32 %v73, %v274
    %276 = vmatmul.f32.gmra.mxu0 %v101
    %v277 = vpop.f32.mrf.mxu0
    %v278 = vadd.f32 %v73, %v277
    %279 = vdwg.mxu0
    %v280 = vld [vmem:[#allocation2] sm:$0xff]
    %v281 = vld [vmem:[#allocation2 + $0x8] sm:$0xff]
    %v282 = vld [vmem:[#allocation2 + $0x10] sm:$0xff]
    %v283 = vld [vmem:[#allocation2 + $0x18] sm:$0xff]
    %v284 = vld [vmem:[#allocation2 + $0x20] sm:$0xff]
    %v285 = vld [vmem:[#allocation2 + $0x28] sm:$0xff]
    %v286 = vld [vmem:[#allocation2 + $0x30] sm:$0xff]
    %v287 = vld [vmem:[#allocation2 + $0x38] sm:$0xff]
    %v288 = vld [vmem:[#allocation2 + $0x40] sm:$0xff]
    %v289 = vld [vmem:[#allocation2 + $0x48] sm:$0xff]
    %v290 = vld [vmem:[#allocation2 + $0x50] sm:$0xff]
    %v291 = vld [vmem:[#allocation2 + $0x58] sm:$0xff]
    %v292 = vld [vmem:[#allocation2 + $0x60] sm:$0xff]
    %v293 = vld [vmem:[#allocation2 + $0x68] sm:$0xff]
    %v294 = vld [vmem:[#allocation2 + $0x70] sm:$0xff]
    %v295 = vld [vmem:[#allocation2 + $0x78] sm:$0xff]
    %v296 = vld [vmem:[#allocation2 + $0x80] sm:$0xff]
    %v297 = vld [vmem:[#allocation2 + $0x88] sm:$0xff]
    %v298 = vld [vmem:[#allocation2 + $0x90] sm:$0xff]
    %v299 = vld [vmem:[#allocation2 + $0x98] sm:$0xff]
    %v300 = vld [vmem:[#allocation2 + $0xa0] sm:$0xff]
    %v301 = vld [vmem:[#allocation2 + $0xa8] sm:$0xff]
    %v302 = vld [vmem:[#allocation2 + $0xb0] sm:$0xff]
    %v303 = vld [vmem:[#allocation2 + $0xb8] sm:$0xff]
    %v304 = vld [vmem:[#allocation2 + $0xc0] sm:$0xff]
    %v305 = vld [vmem:[#allocation2 + $0xc8] sm:$0xff]
    %v306 = vld [vmem:[#allocation2 + $0xd0] sm:$0xff]
    %v307 = vld [vmem:[#allocation2 + $0xd8] sm:$0xff]
    %v308 = vld [vmem:[#allocation2 + $0xe0] sm:$0xff]
    %v309 = vld [vmem:[#allocation2 + $0xe8] sm:$0xff]
    %v310 = vld [vmem:[#allocation2 + $0xf0] sm:$0xff]
    %v311 = vld [vmem:[#allocation2 + $0xf8] sm:$0xff]
    %v312 = vld [vmem:[#allocation2 + $0x100] sm:$0xff]
    %v313 = vld [vmem:[#allocation2 + $0x108] sm:$0xff]
    %v314 = vld [vmem:[#allocation2 + $0x110] sm:$0xff]
    %v315 = vld [vmem:[#allocation2 + $0x118] sm:$0xff]
    %v316 = vld [vmem:[#allocation2 + $0x120] sm:$0xff]
    %v317 = vld [vmem:[#allocation2 + $0x128] sm:$0xff]
    %v318 = vld [vmem:[#allocation2 + $0x130] sm:$0xff]
    %v319 = vld [vmem:[#allocation2 + $0x138] sm:$0xff]
    %v320 = vld [vmem:[#allocation2 + $0x140] sm:$0xff]
    %v321 = vld [vmem:[#allocation2 + $0x148] sm:$0xff]
    %v322 = vld [vmem:[#allocation2 + $0x150] sm:$0xff]
    %v323 = vld [vmem:[#allocation2 + $0x158] sm:$0xff]
    %v324 = vld [vmem:[#allocation2 + $0x160] sm:$0xff]
    %v325 = vld [vmem:[#allocation2 + $0x168] sm:$0xff]
    %v326 = vld [vmem:[#allocation2 + $0x170] sm:$0xff]
    %v327 = vld [vmem:[#allocation2 + $0x178] sm:$0xff]
    %v328 = vld [vmem:[#allocation2 + $0x180] sm:$0xff]
    %v329 = vld [vmem:[#allocation2 + $0x188] sm:$0xff]
    %v330 = vld [vmem:[#allocation2 + $0x190] sm:$0xff]
    %v331 = vld [vmem:[#allocation2 + $0x198] sm:$0xff]
    %v332 = vld [vmem:[#allocation2 + $0x1a0] sm:$0xff]
    %v333 = vld [vmem:[#allocation2 + $0x1a8] sm:$0xff]
    %v334 = vld [vmem:[#allocation2 + $0x1b0] sm:$0xff]
    %v335 = vld [vmem:[#allocation2 + $0x1b8] sm:$0xff]
    %v336 = vld [vmem:[#allocation2 + $0x1c0] sm:$0xff]
    %v337 = vld [vmem:[#allocation2 + $0x1c8] sm:$0xff]
    %v338 = vld [vmem:[#allocation2 + $0x1d0] sm:$0xff]
    %v339 = vld [vmem:[#allocation2 + $0x1d8] sm:$0xff]
    %v340 = vld [vmem:[#allocation2 + $0x1e0] sm:$0xff]
    %v341 = vld [vmem:[#allocation2 + $0x1e8] sm:$0xff]
    %v342 = vld [vmem:[#allocation2 + $0x1f0] sm:$0xff]
    %v343 = vld [vmem:[#allocation2 + $0x1f8] sm:$0xff]
    %344 = vmatpush.msra.mxu0 %v340
    %345 = vmatpush.msra.mxu0 %v336
    %346 = vmatpush.msra.mxu0 %v332
    %347 = vmatpush.msra.mxu0 %v328
    %348 = vmatpush.msra.mxu0 %v324
    %349 = vmatpush.msra.mxu0 %v320
    %350 = vmatpush.msra.mxu0 %v316
    %351 = vmatpush.msra.mxu0 %v312
    %352 = vmatpush.msra.mxu0 %v308
    %353 = vmatpush.msra.mxu0 %v304
    %354 = vmatpush.msra.mxu0 %v300
    %355 = vmatpush.msra.mxu0 %v296
    %356 = vmatpush.msra.mxu0 %v292
    %357 = vmatpush.msra.mxu0 %v288
    %358 = vmatpush.msra.mxu0 %v284
    %359 = vmatpush.msra.mxu0 %v280
    %360 = vmatmul.f32.gmra.mxu0 0.0
    %v361 = vpop.f32.mrf.mxu0
    %v362 = vadd.f32 0.0, %v361
    %363 = vdwg.mxu0
    %364 = vmatpush.msra.mxu0 %v341
    %365 = vmatpush.msra.mxu0 %v337
    %366 = vmatpush.msra.mxu0 %v333
    %367 = vmatpush.msra.mxu0 %v329
    %368 = vmatpush.msra.mxu0 %v325
    %369 = vmatpush.msra.mxu0 %v321
    %370 = vmatpush.msra.mxu0 %v317
    %371 = vmatpush.msra.mxu0 %v313
    %372 = vmatpush.msra.mxu0 %v309
    %373 = vmatpush.msra.mxu0 %v305
    %374 = vmatpush.msra.mxu0 %v301
    %375 = vmatpush.msra.mxu0 %v297
    %376 = vmatpush.msra.mxu0 %v293
    %377 = vmatpush.msra.mxu0 %v289
    %378 = vmatpush.msra.mxu0 %v285
    %379 = vmatpush.msra.mxu0 %v281
    %380 = vmatmul.f32.gmra.mxu0 0.0
    %v381 = vpop.f32.mrf.mxu0
    %v382 = vadd.f32 0.0, %v381
    %383 = vdwg.mxu0
    %384 = vmatpush.msra.mxu0 %v342
    %385 = vmatpush.msra.mxu0 %v338
    %386 = vmatpush.msra.mxu0 %v334
    %387 = vmatpush.msra.mxu0 %v330
    %388 = vmatpush.msra.mxu0 %v326
    %389 = vmatpush.msra.mxu0 %v322
    %390 = vmatpush.msra.mxu0 %v318
    %391 = vmatpush.msra.mxu0 %v314
    %392 = vmatpush.msra.mxu0 %v310
    %393 = vmatpush.msra.mxu0 %v306
    %394 = vmatpush.msra.mxu0 %v302
    %395 = vmatpush.msra.mxu0 %v298
    %396 = vmatpush.msra.mxu0 %v294
    %397 = vmatpush.msra.mxu0 %v290
    %398 = vmatpush.msra.mxu0 %v286
    %399 = vmatpush.msra.mxu0 %v282
    %400 = vmatmul.f32.gmra.mxu0 0.0
    %v401 = vpop.f32.mrf.mxu0
    %v402 = vadd.f32 0.0, %v401
    %403 = vdwg.mxu0
    %404 = vmatpush.msra.mxu0 %v343
    %405 = vmatpush.msra.mxu0 %v339
    %406 = vmatpush.msra.mxu0 %v335
    %407 = vmatpush.msra.mxu0 %v331
    %408 = vmatpush.msra.mxu0 %v327
    %409 = vmatpush.msra.mxu0 %v323
    %410 = vmatpush.msra.mxu0 %v319
    %411 = vmatpush.msra.mxu0 %v315
    %412 = vmatpush.msra.mxu0 %v311
    %413 = vmatpush.msra.mxu0 %v307
    %414 = vmatpush.msra.mxu0 %v303
    %415 = vmatpush.msra.mxu0 %v299
    %416 = vmatpush.msra.mxu0 %v295
    %417 = vmatpush.msra.mxu0 %v291
    %418 = vmatpush.msra.mxu0 %v287
    %419 = vmatpush.msra.mxu0 %v283
    %420 = vmatmul.f32.gmra.mxu0 0.0
    %v421 = vpop.f32.mrf.mxu0
    %v422 = vadd.f32 0.0, %v421
    %423 = vdwg.mxu0
    %v424 = vadd.f32 %v134, %v362
    %v425 = vadd.f32 %v175, %v382
    %v426 = vadd.f32 %v216, %v402
    %v427 = vadd.f32 %v257, %v422
    %v428 = vxor.u32 %v424, 2147483648
    %v429 = vmul.f32 %v428, 1.442695
    %v430 = vpow.pop %v429
    %v431 = vadd.f32 %v430, 1.0
    %v432 = vrcp.pop %v431
    %v433 = vmul.f32 %v431, %v432
    %v434 = vsub.f32 1.0, %v433
    %v435 = vmul.f32 %v432, %v434
    %v436 = vadd.f32 %v432, %v435
    %vm437 = vweird.f32 %v431
    %vm438 = vweird.f32 %v432
    %vm439 = vmor %vm437, %vm438
    %v440 = vsel %vm439, %v432, %v436
    %v441 = vand.u32 2147483647, %v431
    %vm442 = vcmp.eq.f32.partialorder %v441, 8.507059e+37
    %v443 = vand.u32 %v431, 2147483648
    %v444 = vor.u32 1.1754944e-38, %v443
    %v445 = vsel %vm442, %v444, %v440
    %v446 = vmul.f32 1.0, %v445
    %v447 = vxor.u32 %v425, 2147483648
    %v448 = vmul.f32 %v447, 1.442695
    %v449 = vpow.pop %v448
    %v450 = vadd.f32 %v449, 1.0
    %v451 = vrcp.pop %v450
    %v452 = vmul.f32 %v450, %v451
    %v453 = vsub.f32 1.0, %v452
    %v454 = vmul.f32 %v451, %v453
    %v455 = vadd.f32 %v451, %v454
    %vm456 = vweird.f32 %v450
    %vm457 = vweird.f32 %v451
    %vm458 = vmor %vm456, %vm457
    %v459 = vsel %vm458, %v451, %v455
    %v460 = vand.u32 2147483647, %v450
    %vm461 = vcmp.eq.f32.partialorder %v460, 8.507059e+37
    %v462 = vand.u32 %v450, 2147483648
    %v463 = vor.u32 1.1754944e-38, %v462
    %v464 = vsel %vm461, %v463, %v459
    %v465 = vmul.f32 1.0, %v464
    %v466 = vtanh.pop %v426
    %v467 = vxor.u32 %v427, 2147483648
    %v468 = vmul.f32 %v467, 1.442695
    %v469 = vpow.pop %v468
    %v470 = vadd.f32 %v469, 1.0
    %v471 = vrcp.pop %v470
    %v472 = vmul.f32 %v470, %v471
    %v473 = vsub.f32 1.0, %v472
    %v474 = vmul.f32 %v471, %v473
    %v475 = vadd.f32 %v471, %v474
    %vm476 = vweird.f32 %v470
    %vm477 = vweird.f32 %v471
    %vm478 = vmor %vm476, %vm477
    %v479 = vsel %vm478, %v471, %v475
    %v480 = vand.u32 2147483647, %v470
    %vm481 = vcmp.eq.f32.partialorder %v480, 8.507059e+37
    %v482 = vand.u32 %v470, 2147483648
    %v483 = vor.u32 1.1754944e-38, %v482
    %v484 = vsel %vm481, %v483, %v479
    %v485 = vmul.f32 1.0, %v484
    %v486 = vmul.f32 %v465, 0.0
    %v487 = vmul.f32 %v446, %v466
    %v488 = vadd.f32 %v486, %v487
    %v489 = vtanh.pop %v488
    %v490 = vmul.f32 %v485, %v489
    %491 = vmatpush.msra.mxu0 %v340
    %492 = vmatpush.msra.mxu0 %v336
    %493 = vmatpush.msra.mxu0 %v332
    %494 = vmatpush.msra.mxu0 %v328
    %495 = vmatpush.msra.mxu0 %v324
    %496 = vmatpush.msra.mxu0 %v320
    %497 = vmatpush.msra.mxu0 %v316
    %498 = vmatpush.msra.mxu0 %v312
    %499 = vmatpush.msra.mxu0 %v308
    %500 = vmatpush.msra.mxu0 %v304
    %501 = vmatpush.msra.mxu0 %v300
    %502 = vmatpush.msra.mxu0 %v296
    %503 = vmatpush.msra.mxu0 %v292
    %504 = vmatpush.msra.mxu0 %v288
    %505 = vmatpush.msra.mxu0 %v284
    %506 = vmatpush.msra.mxu0 %v280
    %507 = vmatmul.f32.gmra.mxu0 %v490
    %v508 = vpop.f32.mrf.mxu0
    %v509 = vadd.f32 0.0, %v508
    %510 = vdwg.mxu0
    %511 = vmatpush.msra.mxu0 %v341
    %512 = vmatpush.msra.mxu0 %v337
    %513 = vmatpush.msra.mxu0 %v333
    %514 = vmatpush.msra.mxu0 %v329
    %515 = vmatpush.msra.mxu0 %v325
    %516 = vmatpush.msra.mxu0 %v321
    %517 = vmatpush.msra.mxu0 %v317
    %518 = vmatpush.msra.mxu0 %v313
    %519 = vmatpush.msra.mxu0 %v309
    %520 = vmatpush.msra.mxu0 %v305
    %521 = vmatpush.msra.mxu0 %v301
    %522 = vmatpush.msra.mxu0 %v297
    %523 = vmatpush.msra.mxu0 %v293
    %524 = vmatpush.msra.mxu0 %v289
    %525 = vmatpush.msra.mxu0 %v285
    %526 = vmatpush.msra.mxu0 %v281
    %527 = vmatmul.f32.gmra.mxu0 %v490
    %v528 = vpop.f32.mrf.mxu0
    %v529 = vadd.f32 0.0, %v528
    %530 = vdwg.mxu0
    %531 = vmatpush.msra.mxu0 %v342
    %532 = vmatpush.msra.mxu0 %v338
    %533 = vmatpush.msra.mxu0 %v334
    %534 = vmatpush.msra.mxu0 %v330
    %535 = vmatpush.msra.mxu0 %v326
    %536 = vmatpush.msra.mxu0 %v322
    %537 = vmatpush.msra.mxu0 %v318
    %538 = vmatpush.msra.mxu0 %v314
    %539 = vmatpush.msra.mxu0 %v310
    %540 = vmatpush.msra.mxu0 %v306
    %541 = vmatpush.msra.mxu0 %v302
    %542 = vmatpush.msra.mxu0 %v298
    %543 = vmatpush.msra.mxu0 %v294
    %544 = vmatpush.msra.mxu0 %v290
    %545 = vmatpush.msra.mxu0 %v286
    %546 = vmatpush.msra.mxu0 %v282
    %547 = vmatmul.f32.gmra.mxu0 %v490
    %v548 = vpop.f32.mrf.mxu0
    %v549 = vadd.f32 0.0, %v548
    %550 = vdwg.mxu0
    %551 = vmatpush.msra.mxu0 %v343
    %552 = vmatpush.msra.mxu0 %v339
    %553 = vmatpush.msra.mxu0 %v335
    %554 = vmatpush.msra.mxu0 %v331
    %555 = vmatpush.msra.mxu0 %v327
    %556 = vmatpush.msra.mxu0 %v323
    %557 = vmatpush.msra.mxu0 %v319
    %558 = vmatpush.msra.mxu0 %v315
    %559 = vmatpush.msra.mxu0 %v311
    %560 = vmatpush.msra.mxu0 %v307
    %561 = vmatpush.msra.mxu0 %v303
    %562 = vmatpush.msra.mxu0 %v299
    %563 = vmatpush.msra.mxu0 %v295
    %564 = vmatpush.msra.mxu0 %v291
    %565 = vmatpush.msra.mxu0 %v287
    %566 = vmatpush.msra.mxu0 %v283
    %567 = vmatmul.f32.gmra.mxu0 %v490
    %v568 = vpop.f32.mrf.mxu0
    %v569 = vadd.f32 0.0, %v568
    %570 = vdwg.mxu0
    %v571 = vadd.f32 %v137, %v509
    %v572 = vadd.f32 %v178, %v529
    %v573 = vadd.f32 %v219, %v549
    %v574 = vadd.f32 %v260, %v569
    %v575 = vxor.u32 %v571, 2147483648
    %v576 = vmul.f32 %v575, 1.442695
    %v577 = vpow.pop %v576
    %v578 = vadd.f32 %v577, 1.0
    %v579 = vrcp.pop %v578
    %v580 = vmul.f32 %v578, %v579
    %v581 = vsub.f32 1.0, %v580
    %v582 = vmul.f32 %v579, %v581
    %v583 = vadd.f32 %v579, %v582
    %vm584 = vweird.f32 %v578
    %vm585 = vweird.f32 %v579
    %vm586 = vmor %vm584, %vm585
    %v587 = vsel %vm586, %v579, %v583
    %v588 = vand.u32 2147483647, %v578
    %vm589 = vcmp.eq.f32.partialorder %v588, 8.507059e+37
    %v590 = vand.u32 %v578, 2147483648
    %v591 = vor.u32 1.1754944e-38, %v590
    %v592 = vsel %vm589, %v591, %v587
    %v593 = vmul.f32 1.0, %v592
    %v594 = vxor.u32 %v572, 2147483648
    %v595 = vmul.f32 %v594, 1.442695
    %v596 = vpow.pop %v595
    %v597 = vadd.f32 %v596, 1.0
    %v598 = vrcp.pop %v597
    %v599 = vmul.f32 %v597, %v598
    %v600 = vsub.f32 1.0, %v599
    %v601 = vmul.f32 %v598, %v600
    %v602 = vadd.f32 %v598, %v601
    %vm603 = vweird.f32 %v597
    %vm604 = vweird.f32 %v598
    %vm605 = vmor %vm603, %vm604
    %v606 = vsel %vm605, %v598, %v602
    %v607 = vand.u32 2147483647, %v597
    %vm608 = vcmp.eq.f32.partialorder %v607, 8.507059e+37
    %v609 = vand.u32 %v597, 2147483648
    %v610 = vor.u32 1.1754944e-38, %v609
    %v611 = vsel %vm608, %v610, %v606
    %v612 = vmul.f32 1.0, %v611
    %v613 = vtanh.pop %v573
    %v614 = vxor.u32 %v574, 2147483648
    %v615 = vmul.f32 %v614, 1.442695
    %v616 = vpow.pop %v615
    %v617 = vadd.f32 %v616, 1.0
    %v618 = vrcp.pop %v617
    %v619 = vmul.f32 %v617, %v618
    %v620 = vsub.f32 1.0, %v619
    %v621 = vmul.f32 %v618, %v620
    %v622 = vadd.f32 %v618, %v621
    %vm623 = vweird.f32 %v617
    %vm624 = vweird.f32 %v618
    %vm625 = vmor %vm623, %vm624
    %v626 = vsel %vm625, %v618, %v622
    %v627 = vand.u32 2147483647, %v617
    %vm628 = vcmp.eq.f32.partialorder %v627, 8.507059e+37
    %v629 = vand.u32 %v617, 2147483648
    %v630 = vor.u32 1.1754944e-38, %v629
    %v631 = vsel %vm628, %v630, %v626
    %v632 = vmul.f32 1.0, %v631
    %v633 = vmul.f32 %v612, %v488
    %v634 = vmul.f32 %v593, %v613
    %v635 = vadd.f32 %v633, %v634
    %v636 = vtanh.pop %v635
    %v637 = vmul.f32 %v632, %v636
    %638 = vmatpush.msra.mxu0 %v340
    %639 = vmatpush.msra.mxu0 %v336
    %640 = vmatpush.msra.mxu0 %v332
    %641 = vmatpush.msra.mxu0 %v328
    %642 = vmatpush.msra.mxu0 %v324
    %643 = vmatpush.msra.mxu0 %v320
    %644 = vmatpush.msra.mxu0 %v316
    %645 = vmatpush.msra.mxu0 %v312
    %646 = vmatpush.msra.mxu0 %v308
    %647 = vmatpush.msra.mxu0 %v304
    %648 = vmatpush.msra.mxu0 %v300
    %649 = vmatpush.msra.mxu0 %v296
    %650 = vmatpush.msra.mxu0 %v292
    %651 = vmatpush.msra.mxu0 %v288
    %652 = vmatpush.msra.mxu0 %v284
    %653 = vmatpush.msra.mxu0 %v280
    %654 = vmatmul.f32.gmra.mxu0 %v637
    %v655 = vpop.f32.mrf.mxu0
    %v656 = vadd.f32 0.0, %v655
    %657 = vdwg.mxu0
    %658 = vmatpush.msra.mxu0 %v341
    %659 = vmatpush.msra.mxu0 %v337
    %660 = vmatpush.msra.mxu0 %v333
    %661 = vmatpush.msra.mxu0 %v329
    %662 = vmatpush.msra.mxu0 %v325
    %663 = vmatpush.msra.mxu0 %v321
    %664 = vmatpush.msra.mxu0 %v317
    %665 = vmatpush.msra.mxu0 %v313
    %666 = vmatpush.msra.mxu0 %v309
    %667 = vmatpush.msra.mxu0 %v305
    %668 = vmatpush.msra.mxu0 %v301
    %669 = vmatpush.msra.mxu0 %v297
    %670 = vmatpush.msra.mxu0 %v293
    %671 = vmatpush.msra.mxu0 %v289
    %672 = vmatpush.msra.mxu0 %v285
    %673 = vmatpush.msra.mxu0 %v281
    %674 = vmatmul.f32.gmra.mxu0 %v637
    %v675 = vpop.f32.mrf.mxu0
    %v676 = vadd.f32 0.0, %v675
    %677 = vdwg.mxu0
    %678 = vmatpush.msra.mxu0 %v342
    %679 = vmatpush.msra.mxu0 %v338
    %680 = vmatpush.msra.mxu0 %v334
    %681 = vmatpush.msra.mxu0 %v330
    %682 = vmatpush.msra.mxu0 %v326
    %683 = vmatpush.msra.mxu0 %v322
    %684 = vmatpush.msra.mxu0 %v318
    %685 = vmatpush.msra.mxu0 %v314
    %686 = vmatpush.msra.mxu0 %v310
    %687 = vmatpush.msra.mxu0 %v306
    %688 = vmatpush.msra.mxu0 %v302
    %689 = vmatpush.msra.mxu0 %v298
    %690 = vmatpush.msra.mxu0 %v294
    %691 = vmatpush.msra.mxu0 %v290
    %692 = vmatpush.msra.mxu0 %v286
    %693 = vmatpush.msra.mxu0 %v282
    %694 = vmatmul.f32.gmra.mxu0 %v637
    %v695 = vpop.f32.mrf.mxu0
    %v696 = vadd.f32 0.0, %v695
    %697 = vdwg.mxu0
    %698 = vmatpush.msra.mxu0 %v343
    %699 = vmatpush.msra.mxu0 %v339
    %700 = vmatpush.msra.mxu0 %v335
    %701 = vmatpush.msra.mxu0 %v331
    %702 = vmatpush.msra.mxu0 %v327
    %703 = vmatpush.msra.mxu0 %v323
    %704 = vmatpush.msra.mxu0 %v319
    %705 = vmatpush.msra.mxu0 %v315
    %706 = vmatpush.msra.mxu0 %v311
    %707 = vmatpush.msra.mxu0 %v307
    %708 = vmatpush.msra.mxu0 %v303
    %709 = vmatpush.msra.mxu0 %v299
    %710 = vmatpush.msra.mxu0 %v295
    %711 = vmatpush.msra.mxu0 %v291
    %712 = vmatpush.msra.mxu0 %v287
    %713 = vmatpush.msra.mxu0 %v283
    %714 = vmatmul.f32.gmra.mxu0 %v637
    %v715 = vpop.f32.mrf.mxu0
    %v716 = vadd.f32 0.0, %v715
    %717 = vdwg.mxu0
    %v718 = vadd.f32 %v140, %v656
    %v719 = vadd.f32 %v181, %v676
    %v720 = vadd.f32 %v222, %v696
    %v721 = vadd.f32 %v263, %v716
    %v722 = vxor.u32 %v718, 2147483648
    %v723 = vmul.f32 %v722, 1.442695
    %v724 = vpow.pop %v723
    %v725 = vadd.f32 %v724, 1.0
    %v726 = vrcp.pop %v725
    %v727 = vmul.f32 %v725, %v726
    %v728 = vsub.f32 1.0, %v727
    %v729 = vmul.f32 %v726, %v728
    %v730 = vadd.f32 %v726, %v729
    %vm731 = vweird.f32 %v725
    %vm732 = vweird.f32 %v726
    %vm733 = vmor %vm731, %vm732
    %v734 = vsel %vm733, %v726, %v730
    %v735 = vand.u32 2147483647, %v725
    %vm736 = vcmp.eq.f32.partialorder %v735, 8.507059e+37
    %v737 = vand.u32 %v725, 2147483648
    %v738 = vor.u32 1.1754944e-38, %v737
    %v739 = vsel %vm736, %v738, %v734
    %v740 = vmul.f32 1.0, %v739
    %v741 = vxor.u32 %v719, 2147483648
    %v742 = vmul.f32 %v741, 1.442695
    %v743 = vpow.pop %v742
    %v744 = vadd.f32 %v743, 1.0
    %v745 = vrcp.pop %v744
    %v746 = vmul.f32 %v744, %v745
    %v747 = vsub.f32 1.0, %v746
    %v748 = vmul.f32 %v745, %v747
    %v749 = vadd.f32 %v745, %v748
    %vm750 = vweird.f32 %v744
    %vm751 = vweird.f32 %v745
    %vm752 = vmor %vm750, %vm751
    %v753 = vsel %vm752, %v745, %v749
    %v754 = vand.u32 2147483647, %v744
    %vm755 = vcmp.eq.f32.partialorder %v754, 8.507059e+37
    %v756 = vand.u32 %v744, 2147483648
    %v757 = vor.u32 1.1754944e-38, %v756
    %v758 = vsel %vm755, %v757, %v753
    %v759 = vmul.f32 1.0, %v758
    %v760 = vtanh.pop %v720
    %v761 = vxor.u32 %v721, 2147483648
    %v762 = vmul.f32 %v761, 1.442695
    %v763 = vpow.pop %v762
    %v764 = vadd.f32 %v763, 1.0
    %v765 = vrcp.pop %v764
    %v766 = vmul.f32 %v764, %v765
    %v767 = vsub.f32 1.0, %v766
    %v768 = vmul.f32 %v765, %v767
    %v769 = vadd.f32 %v765, %v768
    %vm770 = vweird.f32 %v764
    %vm771 = vweird.f32 %v765
    %vm772 = vmor %vm770, %vm771
    %v773 = vsel %vm772, %v765, %v769
    %v774 = vand.u32 2147483647, %v764
    %vm775 = vcmp.eq.f32.partialorder %v774, 8.507059e+37
    %v776 = vand.u32 %v764, 2147483648
    %v777 = vor.u32 1.1754944e-38, %v776
    %v778 = vsel %vm775, %v777, %v773
    %v779 = vmul.f32 1.0, %v778
    %v780 = vmul.f32 %v759, %v635
    %v781 = vmul.f32 %v740, %v760
    %v782 = vadd.f32 %v780, %v781
    %v783 = vtanh.pop %v782
    %v784 = vmul.f32 %v779, %v783
    %785 = vmatpush.msra.mxu0 %v340
    %786 = vmatpush.msra.mxu0 %v336
    %787 = vmatpush.msra.mxu0 %v332
    %788 = vmatpush.msra.mxu0 %v328
    %789 = vmatpush.msra.mxu0 %v324
    %790 = vmatpush.msra.mxu0 %v320
    %791 = vmatpush.msra.mxu0 %v316
    %792 = vmatpush.msra.mxu0 %v312
    %793 = vmatpush.msra.mxu0 %v308
    %794 = vmatpush.msra.mxu0 %v304
    %795 = vmatpush.msra.mxu0 %v300
    %796 = vmatpush.msra.mxu0 %v296
    %797 = vmatpush.msra.mxu0 %v292
    %798 = vmatpush.msra.mxu0 %v288
    %799 = vmatpush.msra.mxu0 %v284
    %800 = vmatpush.msra.mxu0 %v280
    %801 = vmatmul.f32.gmra.mxu0 %v784
    %v802 = vpop.f32.mrf.mxu0
    %v803 = vadd.f32 0.0, %v802
    %804 = vdwg.mxu0
    %805 = vmatpush.msra.mxu0 %v341
    %806 = vmatpush.msra.mxu0 %v337
    %807 = vmatpush.msra.mxu0 %v333
    %808 = vmatpush.msra.mxu0 %v329
    %809 = vmatpush.msra.mxu0 %v325
    %810 = vmatpush.msra.mxu0 %v321
    %811 = vmatpush.msra.mxu0 %v317
    %812 = vmatpush.msra.mxu0 %v313
    %813 = vmatpush.msra.mxu0 %v309
    %814 = vmatpush.msra.mxu0 %v305
    %815 = vmatpush.msra.mxu0 %v301
    %816 = vmatpush.msra.mxu0 %v297
    %817 = vmatpush.msra.mxu0 %v293
    %818 = vmatpush.msra.mxu0 %v289
    %819 = vmatpush.msra.mxu0 %v285
    %820 = vmatpush.msra.mxu0 %v281
    %821 = vmatmul.f32.gmra.mxu0 %v784
    %v822 = vpop.f32.mrf.mxu0
    %v823 = vadd.f32 0.0, %v822
    %824 = vdwg.mxu0
    %825 = vmatpush.msra.mxu0 %v342
    %826 = vmatpush.msra.mxu0 %v338
    %827 = vmatpush.msra.mxu0 %v334
    %828 = vmatpush.msra.mxu0 %v330
    %829 = vmatpush.msra.mxu0 %v326
    %830 = vmatpush.msra.mxu0 %v322
    %831 = vmatpush.msra.mxu0 %v318
    %832 = vmatpush.msra.mxu0 %v314
    %833 = vmatpush.msra.mxu0 %v310
    %834 = vmatpush.msra.mxu0 %v306
    %835 = vmatpush.msra.mxu0 %v302
    %836 = vmatpush.msra.mxu0 %v298
    %837 = vmatpush.msra.mxu0 %v294
    %838 = vmatpush.msra.mxu0 %v290
    %839 = vmatpush.msra.mxu0 %v286
    %840 = vmatpush.msra.mxu0 %v282
    %841 = vmatmul.f32.gmra.mxu0 %v784
    %v842 = vpop.f32.mrf.mxu0
    %v843 = vadd.f32 0.0, %v842
    %844 = vdwg.mxu0
    %845 = vmatpush.msra.mxu0 %v343
    %846 = vmatpush.msra.mxu0 %v339
    %847 = vmatpush.msra.mxu0 %v335
    %848 = vmatpush.msra.mxu0 %v331
    %849 = vmatpush.msra.mxu0 %v327
    %850 = vmatpush.msra.mxu0 %v323
    %851 = vmatpush.msra.mxu0 %v319
    %852 = vmatpush.msra.mxu0 %v315
    %853 = vmatpush.msra.mxu0 %v311
    %854 = vmatpush.msra.mxu0 %v307
    %855 = vmatpush.msra.mxu0 %v303
    %856 = vmatpush.msra.mxu0 %v299
    %857 = vmatpush.msra.mxu0 %v295
    %858 = vmatpush.msra.mxu0 %v291
    %859 = vmatpush.msra.mxu0 %v287
    %860 = vmatpush.msra.mxu0 %v283
    %861 = vmatmul.f32.gmra.mxu0 %v784
    %v862 = vpop.f32.mrf.mxu0
    %v863 = vadd.f32 0.0, %v862
    %864 = vdwg.mxu0
    %v865 = vadd.f32 %v143, %v803
    %v866 = vadd.f32 %v184, %v823
    %v867 = vadd.f32 %v225, %v843
    %v868 = vadd.f32 %v266, %v863
    %v869 = vxor.u32 %v865, 2147483648
    %v870 = vmul.f32 %v869, 1.442695
    %v871 = vpow.pop %v870
    %v872 = vadd.f32 %v871, 1.0
    %v873 = vrcp.pop %v872
    %v874 = vmul.f32 %v872, %v873
    %v875 = vsub.f32 1.0, %v874
    %v876 = vmul.f32 %v873, %v875
    %v877 = vadd.f32 %v873, %v876
    %vm878 = vweird.f32 %v872
    %vm879 = vweird.f32 %v873
    %vm880 = vmor %vm878, %vm879
    %v881 = vsel %vm880, %v873, %v877
    %v882 = vand.u32 2147483647, %v872
    %vm883 = vcmp.eq.f32.partialorder %v882, 8.507059e+37
    %v884 = vand.u32 %v872, 2147483648
    %v885 = vor.u32 1.1754944e-38, %v884
    %v886 = vsel %vm883, %v885, %v881
    %v887 = vmul.f32 1.0, %v886
    %v888 = vxor.u32 %v866, 2147483648
    %v889 = vmul.f32 %v888, 1.442695
    %v890 = vpow.pop %v889
    %v891 = vadd.f32 %v890, 1.0
    %v892 = vrcp.pop %v891
    %v893 = vmul.f32 %v891, %v892
    %v894 = vsub.f32 1.0, %v893
    %v895 = vmul.f32 %v892, %v894
    %v896 = vadd.f32 %v892, %v895
    %vm897 = vweird.f32 %v891
    %vm898 = vweird.f32 %v892
    %vm899 = vmor %vm897, %vm898
    %v900 = vsel %vm899, %v892, %v896
    %v901 = vand.u32 2147483647, %v891
    %vm902 = vcmp.eq.f32.partialorder %v901, 8.507059e+37
    %v903 = vand.u32 %v891, 2147483648
    %v904 = vor.u32 1.1754944e-38, %v903
    %v905 = vsel %vm902, %v904, %v900
    %v906 = vmul.f32 1.0, %v905
    %v907 = vtanh.pop %v867
    %v908 = vxor.u32 %v868, 2147483648
    %v909 = vmul.f32 %v908, 1.442695
    %v910 = vpow.pop %v909
    %v911 = vadd.f32 %v910, 1.0
    %v912 = vrcp.pop %v911
    %v913 = vmul.f32 %v911, %v912
    %v914 = vsub.f32 1.0, %v913
    %v915 = vmul.f32 %v912, %v914
    %v916 = vadd.f32 %v912, %v915
    %vm917 = vweird.f32 %v911
    %vm918 = vweird.f32 %v912
    %vm919 = vmor %vm917, %vm918
    %v920 = vsel %vm919, %v912, %v916
    %v921 = vand.u32 2147483647, %v911
    %vm922 = vcmp.eq.f32.partialorder %v921, 8.507059e+37
    %v923 = vand.u32 %v911, 2147483648
    %v924 = vor.u32 1.1754944e-38, %v923
    %v925 = vsel %vm922, %v924, %v920
    %v926 = vmul.f32 1.0, %v925
    %v927 = vmul.f32 %v906, %v782
    %v928 = vmul.f32 %v887, %v907
    %v929 = vadd.f32 %v927, %v928
    %v930 = vtanh.pop %v929
    %v931 = vmul.f32 %v926, %v930
    %932 = vmatpush.msra.mxu0 %v340
    %933 = vmatpush.msra.mxu0 %v336
    %934 = vmatpush.msra.mxu0 %v332
    %935 = vmatpush.msra.mxu0 %v328
    %936 = vmatpush.msra.mxu0 %v324
    %937 = vmatpush.msra.mxu0 %v320
    %938 = vmatpush.msra.mxu0 %v316
    %939 = vmatpush.msra.mxu0 %v312
    %940 = vmatpush.msra.mxu0 %v308
    %941 = vmatpush.msra.mxu0 %v304
    %942 = vmatpush.msra.mxu0 %v300
    %943 = vmatpush.msra.mxu0 %v296
    %944 = vmatpush.msra.mxu0 %v292
    %945 = vmatpush.msra.mxu0 %v288
    %946 = vmatpush.msra.mxu0 %v284
    %947 = vmatpush.msra.mxu0 %v280
    %948 = vmatmul.f32.gmra.mxu0 %v931
    %v949 = vpop.f32.mrf.mxu0
    %v950 = vadd.f32 0.0, %v949
    %951 = vdwg.mxu0
    %952 = vmatpush.msra.mxu0 %v341
    %953 = vmatpush.msra.mxu0 %v337
    %954 = vmatpush.msra.mxu0 %v333
    %955 = vmatpush.msra.mxu0 %v329
    %956 = vmatpush.msra.mxu0 %v325
    %957 = vmatpush.msra.mxu0 %v321
    %958 = vmatpush.msra.mxu0 %v317
    %959 = vmatpush.msra.mxu0 %v313
    %960 = vmatpush.msra.mxu0 %v309
    %961 = vmatpush.msra.mxu0 %v305
    %962 = vmatpush.msra.mxu0 %v301
    %963 = vmatpush.msra.mxu0 %v297
    %964 = vmatpush.msra.mxu0 %v293
    %965 = vmatpush.msra.mxu0 %v289
    %966 = vmatpush.msra.mxu0 %v285
    %967 = vmatpush.msra.mxu0 %v281
    %968 = vmatmul.f32.gmra.mxu0 %v931
    %v969 = vpop.f32.mrf.mxu0
    %v970 = vadd.f32 0.0, %v969
    %971 = vdwg.mxu0
    %972 = vmatpush.msra.mxu0 %v342
    %973 = vmatpush.msra.mxu0 %v338
    %974 = vmatpush.msra.mxu0 %v334
    %975 = vmatpush.msra.mxu0 %v330
    %976 = vmatpush.msra.mxu0 %v326
    %977 = vmatpush.msra.mxu0 %v322
    %978 = vmatpush.msra.mxu0 %v318
    %979 = vmatpush.msra.mxu0 %v314
    %980 = vmatpush.msra.mxu0 %v310
    %981 = vmatpush.msra.mxu0 %v306
    %982 = vmatpush.msra.mxu0 %v302
    %983 = vmatpush.msra.mxu0 %v298
    %984 = vmatpush.msra.mxu0 %v294
    %985 = vmatpush.msra.mxu0 %v290
    %986 = vmatpush.msra.mxu0 %v286
    %987 = vmatpush.msra.mxu0 %v282
    %988 = vmatmul.f32.gmra.mxu0 %v931
    %v989 = vpop.f32.mrf.mxu0
    %v990 = vadd.f32 0.0, %v989
    %991 = vdwg.mxu0
    %992 = vmatpush.msra.mxu0 %v343
    %993 = vmatpush.msra.mxu0 %v339
    %994 = vmatpush.msra.mxu0 %v335
    %995 = vmatpush.msra.mxu0 %v331
    %996 = vmatpush.msra.mxu0 %v327
    %997 = vmatpush.msra.mxu0 %v323
    %998 = vmatpush.msra.mxu0 %v319
    %999 = vmatpush.msra.mxu0 %v315
    %1000 = vmatpush.msra.mxu0 %v311
    %1001 = vmatpush.msra.mxu0 %v307
    %1002 = vmatpush.msra.mxu0 %v303
    %1003 = vmatpush.msra.mxu0 %v299
    %1004 = vmatpush.msra.mxu0 %v295
    %1005 = vmatpush.msra.mxu0 %v291
    %1006 = vmatpush.msra.mxu0 %v287
    %1007 = vmatpush.msra.mxu0 %v283
    %1008 = vmatmul.f32.gmra.mxu0 %v931
    %v1009 = vpop.f32.mrf.mxu0
    %v1010 = vadd.f32 0.0, %v1009
    %1011 = vdwg.mxu0
    %v1012 = vadd.f32 %v146, %v950
    %v1013 = vadd.f32 %v187, %v970
    %v1014 = vadd.f32 %v228, %v990
    %v1015 = vadd.f32 %v269, %v1010
    %v1016 = vxor.u32 %v1012, 2147483648
    %v1017 = vmul.f32 %v1016, 1.442695
    %v1018 = vpow.pop %v1017
    %v1019 = vadd.f32 %v1018, 1.0
    %v1020 = vrcp.pop %v1019
    %v1021 = vmul.f32 %v1019, %v1020
    %v1022 = vsub.f32 1.0, %v1021
    %v1023 = vmul.f32 %v1020, %v1022
    %v1024 = vadd.f32 %v1020, %v1023
    %vm1025 = vweird.f32 %v1019
    %vm1026 = vweird.f32 %v1020
    %vm1027 = vmor %vm1025, %vm1026
    %v1028 = vsel %vm1027, %v1020, %v1024
    %v1029 = vand.u32 2147483647, %v1019
    %vm1030 = vcmp.eq.f32.partialorder %v1029, 8.507059e+37
    %v1031 = vand.u32 %v1019, 2147483648
    %v1032 = vor.u32 1.1754944e-38, %v1031
    %v1033 = vsel %vm1030, %v1032, %v1028
    %v1034 = vmul.f32 1.0, %v1033
    %v1035 = vxor.u32 %v1013, 2147483648
    %v1036 = vmul.f32 %v1035, 1.442695
    %v1037 = vpow.pop %v1036
    %v1038 = vadd.f32 %v1037, 1.0
    %v1039 = vrcp.pop %v1038
    %v1040 = vmul.f32 %v1038, %v1039
    %v1041 = vsub.f32 1.0, %v1040
    %v1042 = vmul.f32 %v1039, %v1041
    %v1043 = vadd.f32 %v1039, %v1042
    %vm1044 = vweird.f32 %v1038
    %vm1045 = vweird.f32 %v1039
    %vm1046 = vmor %vm1044, %vm1045
    %v1047 = vsel %vm1046, %v1039, %v1043
    %v1048 = vand.u32 2147483647, %v1038
    %vm1049 = vcmp.eq.f32.partialorder %v1048, 8.507059e+37
    %v1050 = vand.u32 %v1038, 2147483648
    %v1051 = vor.u32 1.1754944e-38, %v1050
    %v1052 = vsel %vm1049, %v1051, %v1047
    %v1053 = vmul.f32 1.0, %v1052
    %v1054 = vtanh.pop %v1014
    %v1055 = vxor.u32 %v1015, 2147483648
    %v1056 = vmul.f32 %v1055, 1.442695
    %v1057 = vpow.pop %v1056
    %v1058 = vadd.f32 %v1057, 1.0
    %v1059 = vrcp.pop %v1058
    %v1060 = vmul.f32 %v1058, %v1059
    %v1061 = vsub.f32 1.0, %v1060
    %v1062 = vmul.f32 %v1059, %v1061
    %v1063 = vadd.f32 %v1059, %v1062
    %vm1064 = vweird.f32 %v1058
    %vm1065 = vweird.f32 %v1059
    %vm1066 = vmor %vm1064, %vm1065
    %v1067 = vsel %vm1066, %v1059, %v1063
    %v1068 = vand.u32 2147483647, %v1058
    %vm1069 = vcmp.eq.f32.partialorder %v1068, 8.507059e+37
    %v1070 = vand.u32 %v1058, 2147483648
    %v1071 = vor.u32 1.1754944e-38, %v1070
    %v1072 = vsel %vm1069, %v1071, %v1067
    %v1073 = vmul.f32 1.0, %v1072
    %v1074 = vmul.f32 %v1053, %v929
    %v1075 = vmul.f32 %v1034, %v1054
    %v1076 = vadd.f32 %v1074, %v1075
    %v1077 = vtanh.pop %v1076
    %v1078 = vmul.f32 %v1073, %v1077
    %1079 = vmatpush.msra.mxu0 %v340
    %1080 = vmatpush.msra.mxu0 %v336
    %1081 = vmatpush.msra.mxu0 %v332
    %1082 = vmatpush.msra.mxu0 %v328
    %1083 = vmatpush.msra.mxu0 %v324
    %1084 = vmatpush.msra.mxu0 %v320
    %1085 = vmatpush.msra.mxu0 %v316
    %1086 = vmatpush.msra.mxu0 %v312
    %1087 = vmatpush.msra.mxu0 %v308
    %1088 = vmatpush.msra.mxu0 %v304
    %1089 = vmatpush.msra.mxu0 %v300
    %1090 = vmatpush.msra.mxu0 %v296
    %1091 = vmatpush.msra.mxu0 %v292
    %1092 = vmatpush.msra.mxu0 %v288
    %1093 = vmatpush.msra.mxu0 %v284
    %1094 = vmatpush.msra.mxu0 %v280
    %1095 = vmatmul.f32.gmra.mxu0 %v1078
    %v1096 = vpop.f32.mrf.mxu0
    %v1097 = vadd.f32 0.0, %v1096
    %1098 = vdwg.mxu0
    %1099 = vmatpush.msra.mxu0 %v341
    %1100 = vmatpush.msra.mxu0 %v337
    %1101 = vmatpush.msra.mxu0 %v333
    %1102 = vmatpush.msra.mxu0 %v329
    %1103 = vmatpush.msra.mxu0 %v325
    %1104 = vmatpush.msra.mxu0 %v321
    %1105 = vmatpush.msra.mxu0 %v317
    %1106 = vmatpush.msra.mxu0 %v313
    %1107 = vmatpush.msra.mxu0 %v309
    %1108 = vmatpush.msra.mxu0 %v305
    %1109 = vmatpush.msra.mxu0 %v301
    %1110 = vmatpush.msra.mxu0 %v297
    %1111 = vmatpush.msra.mxu0 %v293
    %1112 = vmatpush.msra.mxu0 %v289
    %1113 = vmatpush.msra.mxu0 %v285
    %1114 = vmatpush.msra.mxu0 %v281
    %1115 = vmatmul.f32.gmra.mxu0 %v1078
    %v1116 = vpop.f32.mrf.mxu0
    %v1117 = vadd.f32 0.0, %v1116
    %1118 = vdwg.mxu0
    %1119 = vmatpush.msra.mxu0 %v342
    %1120 = vmatpush.msra.mxu0 %v338
    %1121 = vmatpush.msra.mxu0 %v334
    %1122 = vmatpush.msra.mxu0 %v330
    %1123 = vmatpush.msra.mxu0 %v326
    %1124 = vmatpush.msra.mxu0 %v322
    %1125 = vmatpush.msra.mxu0 %v318
    %1126 = vmatpush.msra.mxu0 %v314
    %1127 = vmatpush.msra.mxu0 %v310
    %1128 = vmatpush.msra.mxu0 %v306
    %1129 = vmatpush.msra.mxu0 %v302
    %1130 = vmatpush.msra.mxu0 %v298
    %1131 = vmatpush.msra.mxu0 %v294
    %1132 = vmatpush.msra.mxu0 %v290
    %1133 = vmatpush.msra.mxu0 %v286
    %1134 = vmatpush.msra.mxu0 %v282
    %1135 = vmatmul.f32.gmra.mxu0 %v1078
    %v1136 = vpop.f32.mrf.mxu0
    %v1137 = vadd.f32 0.0, %v1136
    %1138 = vdwg.mxu0
    %1139 = vmatpush.msra.mxu0 %v343
    %1140 = vmatpush.msra.mxu0 %v339
    %1141 = vmatpush.msra.mxu0 %v335
    %1142 = vmatpush.msra.mxu0 %v331
    %1143 = vmatpush.msra.mxu0 %v327
    %1144 = vmatpush.msra.mxu0 %v323
    %1145 = vmatpush.msra.mxu0 %v319
    %1146 = vmatpush.msra.mxu0 %v315
    %1147 = vmatpush.msra.mxu0 %v311
    %1148 = vmatpush.msra.mxu0 %v307
    %1149 = vmatpush.msra.mxu0 %v303
    %1150 = vmatpush.msra.mxu0 %v299
    %1151 = vmatpush.msra.mxu0 %v295
    %1152 = vmatpush.msra.mxu0 %v291
    %1153 = vmatpush.msra.mxu0 %v287
    %1154 = vmatpush.msra.mxu0 %v283
    %1155 = vmatmul.f32.gmra.mxu0 %v1078
    %v1156 = vpop.f32.mrf.mxu0
    %v1157 = vadd.f32 0.0, %v1156
    %1158 = vdwg.mxu0
    %v1159 = vadd.f32 %v149, %v1097
    %v1160 = vadd.f32 %v190, %v1117
    %v1161 = vadd.f32 %v231, %v1137
    %v1162 = vadd.f32 %v272, %v1157
    %v1163 = vxor.u32 %v1159, 2147483648
    %v1164 = vmul.f32 %v1163, 1.442695
    %v1165 = vpow.pop %v1164
    %v1166 = vadd.f32 %v1165, 1.0
    %v1167 = vrcp.pop %v1166
    %v1168 = vmul.f32 %v1166, %v1167
    %v1169 = vsub.f32 1.0, %v1168
    %v1170 = vmul.f32 %v1167, %v1169
    %v1171 = vadd.f32 %v1167, %v1170
    %vm1172 = vweird.f32 %v1166
    %vm1173 = vweird.f32 %v1167
    %vm1174 = vmor %vm1172, %vm1173
    %v1175 = vsel %vm1174, %v1167, %v1171
    %v1176 = vand.u32 2147483647, %v1166
    %vm1177 = vcmp.eq.f32.partialorder %v1176, 8.507059e+37
    %v1178 = vand.u32 %v1166, 2147483648
    %v1179 = vor.u32 1.1754944e-38, %v1178
    %v1180 = vsel %vm1177, %v1179, %v1175
    %v1181 = vmul.f32 1.0, %v1180
    %v1182 = vxor.u32 %v1160, 2147483648
    %v1183 = vmul.f32 %v1182, 1.442695
    %v1184 = vpow.pop %v1183
    %v1185 = vadd.f32 %v1184, 1.0
    %v1186 = vrcp.pop %v1185
    %v1187 = vmul.f32 %v1185, %v1186
    %v1188 = vsub.f32 1.0, %v1187
    %v1189 = vmul.f32 %v1186, %v1188
    %v1190 = vadd.f32 %v1186, %v1189
    %vm1191 = vweird.f32 %v1185
    %vm1192 = vweird.f32 %v1186
    %vm1193 = vmor %vm1191, %vm1192
    %v1194 = vsel %vm1193, %v1186, %v1190
    %v1195 = vand.u32 2147483647, %v1185
    %vm1196 = vcmp.eq.f32.partialorder %v1195, 8.507059e+37
    %v1197 = vand.u32 %v1185, 2147483648
    %v1198 = vor.u32 1.1754944e-38, %v1197
    %v1199 = vsel %vm1196, %v1198, %v1194
    %v1200 = vmul.f32 1.0, %v1199
    %v1201 = vtanh.pop %v1161
    %v1202 = vxor.u32 %v1162, 2147483648
    %v1203 = vmul.f32 %v1202, 1.442695
    %v1204 = vpow.pop %v1203
    %v1205 = vadd.f32 %v1204, 1.0
    %v1206 = vrcp.pop %v1205
    %v1207 = vmul.f32 %v1205, %v1206
    %v1208 = vsub.f32 1.0, %v1207
    %v1209 = vmul.f32 %v1206, %v1208
    %v1210 = vadd.f32 %v1206, %v1209
    %vm1211 = vweird.f32 %v1205
    %vm1212 = vweird.f32 %v1206
    %vm1213 = vmor %vm1211, %vm1212
    %v1214 = vsel %vm1213, %v1206, %v1210
    %v1215 = vand.u32 2147483647, %v1205
    %vm1216 = vcmp.eq.f32.partialorder %v1215, 8.507059e+37
    %v1217 = vand.u32 %v1205, 2147483648
    %v1218 = vor.u32 1.1754944e-38, %v1217
    %v1219 = vsel %vm1216, %v1218, %v1214
    %v1220 = vmul.f32 1.0, %v1219
    %v1221 = vmul.f32 %v1200, %v1076
    %v1222 = vmul.f32 %v1181, %v1201
    %v1223 = vadd.f32 %v1221, %v1222
    %v1224 = vtanh.pop %v1223
    %v1225 = vmul.f32 %v1220, %v1224
    %1226 = vmatpush.msra.mxu0 %v340
    %1227 = vmatpush.msra.mxu0 %v336
    %1228 = vmatpush.msra.mxu0 %v332
    %1229 = vmatpush.msra.mxu0 %v328
    %1230 = vmatpush.msra.mxu0 %v324
    %1231 = vmatpush.msra.mxu0 %v320
    %1232 = vmatpush.msra.mxu0 %v316
    %1233 = vmatpush.msra.mxu0 %v312
    %1234 = vmatpush.msra.mxu0 %v308
    %1235 = vmatpush.msra.mxu0 %v304
    %1236 = vmatpush.msra.mxu0 %v300
    %1237 = vmatpush.msra.mxu0 %v296
    %1238 = vmatpush.msra.mxu0 %v292
    %1239 = vmatpush.msra.mxu0 %v288
    %1240 = vmatpush.msra.mxu0 %v284
    %1241 = vmatpush.msra.mxu0 %v280
    %1242 = vmatmul.f32.gmra.mxu0 %v1225
    %v1243 = vpop.f32.mrf.mxu0
    %v1244 = vadd.f32 0.0, %v1243
    %1245 = vdwg.mxu0
    %1246 = vmatpush.msra.mxu0 %v341
    %1247 = vmatpush.msra.mxu0 %v337
    %1248 = vmatpush.msra.mxu0 %v333
    %1249 = vmatpush.msra.mxu0 %v329
    %1250 = vmatpush.msra.mxu0 %v325
    %1251 = vmatpush.msra.mxu0 %v321
    %1252 = vmatpush.msra.mxu0 %v317
    %1253 = vmatpush.msra.mxu0 %v313
    %1254 = vmatpush.msra.mxu0 %v309
    %1255 = vmatpush.msra.mxu0 %v305
    %1256 = vmatpush.msra.mxu0 %v301
    %1257 = vmatpush.msra.mxu0 %v297
    %1258 = vmatpush.msra.mxu0 %v293
    %1259 = vmatpush.msra.mxu0 %v289
    %1260 = vmatpush.msra.mxu0 %v285
    %1261 = vmatpush.msra.mxu0 %v281
    %1262 = vmatmul.f32.gmra.mxu0 %v1225
    %v1263 = vpop.f32.mrf.mxu0
    %v1264 = vadd.f32 0.0, %v1263
    %1265 = vdwg.mxu0
    %1266 = vmatpush.msra.mxu0 %v342
    %1267 = vmatpush.msra.mxu0 %v338
    %1268 = vmatpush.msra.mxu0 %v334
    %1269 = vmatpush.msra.mxu0 %v330
    %1270 = vmatpush.msra.mxu0 %v326
    %1271 = vmatpush.msra.mxu0 %v322
    %1272 = vmatpush.msra.mxu0 %v318
    %1273 = vmatpush.msra.mxu0 %v314
    %1274 = vmatpush.msra.mxu0 %v310
    %1275 = vmatpush.msra.mxu0 %v306
    %1276 = vmatpush.msra.mxu0 %v302
    %1277 = vmatpush.msra.mxu0 %v298
    %1278 = vmatpush.msra.mxu0 %v294
    %1279 = vmatpush.msra.mxu0 %v290
    %1280 = vmatpush.msra.mxu0 %v286
    %1281 = vmatpush.msra.mxu0 %v282
    %1282 = vmatmul.f32.gmra.mxu0 %v1225
    %v1283 = vpop.f32.mrf.mxu0
    %v1284 = vadd.f32 0.0, %v1283
    %1285 = vdwg.mxu0
    %1286 = vmatpush.msra.mxu0 %v343
    %1287 = vmatpush.msra.mxu0 %v339
    %1288 = vmatpush.msra.mxu0 %v335
    %1289 = vmatpush.msra.mxu0 %v331
    %1290 = vmatpush.msra.mxu0 %v327
    %1291 = vmatpush.msra.mxu0 %v323
    %1292 = vmatpush.msra.mxu0 %v319
    %1293 = vmatpush.msra.mxu0 %v315
    %1294 = vmatpush.msra.mxu0 %v311
    %1295 = vmatpush.msra.mxu0 %v307
    %1296 = vmatpush.msra.mxu0 %v303
    %1297 = vmatpush.msra.mxu0 %v299
    %1298 = vmatpush.msra.mxu0 %v295
    %1299 = vmatpush.msra.mxu0 %v291
    %1300 = vmatpush.msra.mxu0 %v287
    %1301 = vmatpush.msra.mxu0 %v283
    %1302 = vmatmul.f32.gmra.mxu0 %v1225
    %v1303 = vpop.f32.mrf.mxu0
    %v1304 = vadd.f32 0.0, %v1303
    %1305 = vdwg.mxu0
    %v1306 = vadd.f32 %v152, %v1244
    %v1307 = vadd.f32 %v193, %v1264
    %v1308 = vadd.f32 %v234, %v1284
    %v1309 = vadd.f32 %v275, %v1304
    %v1310 = vxor.u32 %v1306, 2147483648
    %v1311 = vmul.f32 %v1310, 1.442695
    %v1312 = vpow.pop %v1311
    %v1313 = vadd.f32 %v1312, 1.0
    %v1314 = vrcp.pop %v1313
    %v1315 = vmul.f32 %v1313, %v1314
    %v1316 = vsub.f32 1.0, %v1315
    %v1317 = vmul.f32 %v1314, %v1316
    %v1318 = vadd.f32 %v1314, %v1317
    %vm1319 = vweird.f32 %v1313
    %vm1320 = vweird.f32 %v1314
    %vm1321 = vmor %vm1319, %vm1320
    %v1322 = vsel %vm1321, %v1314, %v1318
    %v1323 = vand.u32 2147483647, %v1313
    %vm1324 = vcmp.eq.f32.partialorder %v1323, 8.507059e+37
    %v1325 = vand.u32 %v1313, 2147483648
    %v1326 = vor.u32 1.1754944e-38, %v1325
    %v1327 = vsel %vm1324, %v1326, %v1322
    %v1328 = vmul.f32 1.0, %v1327
    %v1329 = vxor.u32 %v1307, 2147483648
    %v1330 = vmul.f32 %v1329, 1.442695
    %v1331 = vpow.pop %v1330
    %v1332 = vadd.f32 %v1331, 1.0
    %v1333 = vrcp.pop %v1332
    %v1334 = vmul.f32 %v1332, %v1333
    %v1335 = vsub.f32 1.0, %v1334
    %v1336 = vmul.f32 %v1333, %v1335
    %v1337 = vadd.f32 %v1333, %v1336
    %vm1338 = vweird.f32 %v1332
    %vm1339 = vweird.f32 %v1333
    %vm1340 = vmor %vm1338, %vm1339
    %v1341 = vsel %vm1340, %v1333, %v1337
    %v1342 = vand.u32 2147483647, %v1332
    %vm1343 = vcmp.eq.f32.partialorder %v1342, 8.507059e+37
    %v1344 = vand.u32 %v1332, 2147483648
    %v1345 = vor.u32 1.1754944e-38, %v1344
    %v1346 = vsel %vm1343, %v1345, %v1341
    %v1347 = vmul.f32 1.0, %v1346
    %v1348 = vtanh.pop %v1308
    %v1349 = vxor.u32 %v1309, 2147483648
    %v1350 = vmul.f32 %v1349, 1.442695
    %v1351 = vpow.pop %v1350
    %v1352 = vadd.f32 %v1351, 1.0
    %v1353 = vrcp.pop %v1352
    %v1354 = vmul.f32 %v1352, %v1353
    %v1355 = vsub.f32 1.0, %v1354
    %v1356 = vmul.f32 %v1353, %v1355
    %v1357 = vadd.f32 %v1353, %v1356
    %vm1358 = vweird.f32 %v1352
    %vm1359 = vweird.f32 %v1353
    %vm1360 = vmor %vm1358, %vm1359
    %v1361 = vsel %vm1360, %v1353, %v1357
    %v1362 = vand.u32 2147483647, %v1352
    %vm1363 = vcmp.eq.f32.partialorder %v1362, 8.507059e+37
    %v1364 = vand.u32 %v1352, 2147483648
    %v1365 = vor.u32 1.1754944e-38, %v1364
    %v1366 = vsel %vm1363, %v1365, %v1361
    %v1367 = vmul.f32 1.0, %v1366
    %v1368 = vmul.f32 %v1347, %v1223
    %v1369 = vmul.f32 %v1328, %v1348
    %v1370 = vadd.f32 %v1368, %v1369
    %v1371 = vtanh.pop %v1370
    %v1372 = vmul.f32 %v1367, %v1371
    %1373 = vmatpush.msra.mxu0 %v340
    %1374 = vmatpush.msra.mxu0 %v336
    %1375 = vmatpush.msra.mxu0 %v332
    %1376 = vmatpush.msra.mxu0 %v328
    %1377 = vmatpush.msra.mxu0 %v324
    %1378 = vmatpush.msra.mxu0 %v320
    %1379 = vmatpush.msra.mxu0 %v316
    %1380 = vmatpush.msra.mxu0 %v312
    %1381 = vmatpush.msra.mxu0 %v308
    %1382 = vmatpush.msra.mxu0 %v304
    %1383 = vmatpush.msra.mxu0 %v300
    %1384 = vmatpush.msra.mxu0 %v296
    %1385 = vmatpush.msra.mxu0 %v292
    %1386 = vmatpush.msra.mxu0 %v288
    %1387 = vmatpush.msra.mxu0 %v284
    %1388 = vmatpush.msra.mxu0 %v280
    %1389 = vmatmul.f32.gmra.mxu0 %v1372
    %v1390 = vpop.f32.mrf.mxu0
    %v1391 = vadd.f32 0.0, %v1390
    %1392 = vdwg.mxu0
    %1393 = vmatpush.msra.mxu0 %v341
    %1394 = vmatpush.msra.mxu0 %v337
    %1395 = vmatpush.msra.mxu0 %v333
    %1396 = vmatpush.msra.mxu0 %v329
    %1397 = vmatpush.msra.mxu0 %v325
    %1398 = vmatpush.msra.mxu0 %v321
    %1399 = vmatpush.msra.mxu0 %v317
    %1400 = vmatpush.msra.mxu0 %v313
    %1401 = vmatpush.msra.mxu0 %v309
    %1402 = vmatpush.msra.mxu0 %v305
    %1403 = vmatpush.msra.mxu0 %v301
    %1404 = vmatpush.msra.mxu0 %v297
    %1405 = vmatpush.msra.mxu0 %v293
    %1406 = vmatpush.msra.mxu0 %v289
    %1407 = vmatpush.msra.mxu0 %v285
    %1408 = vmatpush.msra.mxu0 %v281
    %1409 = vmatmul.f32.gmra.mxu0 %v1372
    %v1410 = vpop.f32.mrf.mxu0
    %v1411 = vadd.f32 0.0, %v1410
    %1412 = vdwg.mxu0
    %1413 = vmatpush.msra.mxu0 %v342
    %1414 = vmatpush.msra.mxu0 %v338
    %1415 = vmatpush.msra.mxu0 %v334
    %1416 = vmatpush.msra.mxu0 %v330
    %1417 = vmatpush.msra.mxu0 %v326
    %1418 = vmatpush.msra.mxu0 %v322
    %1419 = vmatpush.msra.mxu0 %v318
    %1420 = vmatpush.msra.mxu0 %v314
    %1421 = vmatpush.msra.mxu0 %v310
    %1422 = vmatpush.msra.mxu0 %v306
    %1423 = vmatpush.msra.mxu0 %v302
    %1424 = vmatpush.msra.mxu0 %v298
    %1425 = vmatpush.msra.mxu0 %v294
    %1426 = vmatpush.msra.mxu0 %v290
    %1427 = vmatpush.msra.mxu0 %v286
    %1428 = vmatpush.msra.mxu0 %v282
    %1429 = vmatmul.f32.gmra.mxu0 %v1372
    %v1430 = vpop.f32.mrf.mxu0
    %v1431 = vadd.f32 0.0, %v1430
    %1432 = vdwg.mxu0
    %1433 = vmatpush.msra.mxu0 %v343
    %1434 = vmatpush.msra.mxu0 %v339
    %1435 = vmatpush.msra.mxu0 %v335
    %1436 = vmatpush.msra.mxu0 %v331
    %1437 = vmatpush.msra.mxu0 %v327
    %1438 = vmatpush.msra.mxu0 %v323
    %1439 = vmatpush.msra.mxu0 %v319
    %1440 = vmatpush.msra.mxu0 %v315
    %1441 = vmatpush.msra.mxu0 %v311
    %1442 = vmatpush.msra.mxu0 %v307
    %1443 = vmatpush.msra.mxu0 %v303
    %1444 = vmatpush.msra.mxu0 %v299
    %1445 = vmatpush.msra.mxu0 %v295
    %1446 = vmatpush.msra.mxu0 %v291
    %1447 = vmatpush.msra.mxu0 %v287
    %1448 = vmatpush.msra.mxu0 %v283
    %1449 = vmatmul.f32.gmra.mxu0 %v1372
    %v1450 = vpop.f32.mrf.mxu0
    %v1451 = vadd.f32 0.0, %v1450
    %1452 = vdwg.mxu0
    %v1453 = vadd.f32 %v155, %v1391
    %v1454 = vadd.f32 %v196, %v1411
    %v1455 = vadd.f32 %v237, %v1431
    %v1456 = vadd.f32 %v278, %v1451
    %v1457 = vxor.u32 %v1453, 2147483648
    %v1458 = vmul.f32 %v1457, 1.442695
    %v1459 = vpow.pop %v1458
    %v1460 = vadd.f32 %v1459, 1.0
    %v1461 = vrcp.pop %v1460
    %v1462 = vmul.f32 %v1460, %v1461
    %v1463 = vsub.f32 1.0, %v1462
    %v1464 = vmul.f32 %v1461, %v1463
    %v1465 = vadd.f32 %v1461, %v1464
    %vm1466 = vweird.f32 %v1460
    %vm1467 = vweird.f32 %v1461
    %vm1468 = vmor %vm1466, %vm1467
    %v1469 = vsel %vm1468, %v1461, %v1465
    %v1470 = vand.u32 2147483647, %v1460
    %vm1471 = vcmp.eq.f32.partialorder %v1470, 8.507059e+37
    %v1472 = vand.u32 %v1460, 2147483648
    %v1473 = vor.u32 1.1754944e-38, %v1472
    %v1474 = vsel %vm1471, %v1473, %v1469
    %v1475 = vmul.f32 1.0, %v1474
    %v1476 = vxor.u32 %v1454, 2147483648
    %v1477 = vmul.f32 %v1476, 1.442695
    %v1478 = vpow.pop %v1477
    %v1479 = vadd.f32 %v1478, 1.0
    %v1480 = vrcp.pop %v1479
    %v1481 = vmul.f32 %v1479, %v1480
    %v1482 = vsub.f32 1.0, %v1481
    %v1483 = vmul.f32 %v1480, %v1482
    %v1484 = vadd.f32 %v1480, %v1483
    %vm1485 = vweird.f32 %v1479
    %vm1486 = vweird.f32 %v1480
    %vm1487 = vmor %vm1485, %vm1486
    %v1488 = vsel %vm1487, %v1480, %v1484
    %v1489 = vand.u32 2147483647, %v1479
    %vm1490 = vcmp.eq.f32.partialorder %v1489, 8.507059e+37
    %v1491 = vand.u32 %v1479, 2147483648
    %v1492 = vor.u32 1.1754944e-38, %v1491
    %v1493 = vsel %vm1490, %v1492, %v1488
    %v1494 = vmul.f32 1.0, %v1493
    %v1495 = vtanh.pop %v1455
    %v1496 = vxor.u32 %v1456, 2147483648
    %v1497 = vmul.f32 %v1496, 1.442695
    %v1498 = vpow.pop %v1497
    %v1499 = vadd.f32 %v1498, 1.0
    %v1500 = vrcp.pop %v1499
    %v1501 = vmul.f32 %v1499, %v1500
    %v1502 = vsub.f32 1.0, %v1501
    %v1503 = vmul.f32 %v1500, %v1502
    %v1504 = vadd.f32 %v1500, %v1503
    %vm1505 = vweird.f32 %v1499
    %vm1506 = vweird.f32 %v1500
    %vm1507 = vmor %vm1505, %vm1506
    %v1508 = vsel %vm1507, %v1500, %v1504
    %v1509 = vand.u32 2147483647, %v1499
    %vm1510 = vcmp.eq.f32.partialorder %v1509, 8.507059e+37
    %v1511 = vand.u32 %v1499, 2147483648
    %v1512 = vor.u32 1.1754944e-38, %v1511
    %v1513 = vsel %vm1510, %v1512, %v1508
    %v1514 = vmul.f32 1.0, %v1513
    %v1515 = vmul.f32 %v1494, %v1370
    %v1516 = vmul.f32 %v1475, %v1495
    %v1517 = vadd.f32 %v1515, %v1516
    %v1518 = vtanh.pop %v1517
    %v1519 = vmul.f32 %v1514, %v1518
    %v1520 = vld [vmem:[%s4] sm:$0xff]
    %v1521 = vld [vmem:[%s4 + $0x8] sm:$0xff]
    %v1522 = vld [vmem:[%s4 + $0x10] sm:$0xff]
    %v1523 = vld [vmem:[%s4 + $0x18] sm:$0xff]
    %v1524 = vld [vmem:[%s4 + $0x20] sm:$0xff]
    %v1525 = vld [vmem:[%s4 + $0x28] sm:$0xff]
    %v1526 = vld [vmem:[%s4 + $0x30] sm:$0xff]
    %v1527 = vld [vmem:[%s4 + $0x38] sm:$0xff]
    %v1528 = vld [vmem:[%s4 + $0x40] sm:$0xff]
    %v1529 = vld [vmem:[%s4 + $0x48] sm:$0xff]
    %v1530 = vld [vmem:[%s4 + $0x50] sm:$0xff]
    %v1531 = vld [vmem:[%s4 + $0x58] sm:$0xff]
    %v1532 = vld [vmem:[%s4 + $0x60] sm:$0xff]
    %v1533 = vld [vmem:[%s4 + $0x68] sm:$0xff]
    %v1534 = vld [vmem:[%s4 + $0x70] sm:$0xff]
    %v1535 = vld [vmem:[%s4 + $0x78] sm:$0xff]
    %v1536 = vld [vmem:[%s5] sm:$0x1]
    %v1538 = vperm.slane %v1536, 0
    %1540 = vmatpush.msra.mxu0 %v1535
    %1541 = vmatpush.msra.mxu0 %v1534
    %1542 = vmatpush.msra.mxu0 %v1533
    %1543 = vmatpush.msra.mxu0 %v1532
    %1544 = vmatpush.msra.mxu0 %v1531
    %1545 = vmatpush.msra.mxu0 %v1530
    %1546 = vmatpush.msra.mxu0 %v1529
    %1547 = vmatpush.msra.mxu0 %v1528
    %1548 = vmatpush.msra.mxu0 %v1527
    %1549 = vmatpush.msra.mxu0 %v1526
    %1550 = vmatpush.msra.mxu0 %v1525
    %1551 = vmatpush.msra.mxu0 %v1524
    %1552 = vmatpush.msra.mxu0 %v1523
    %1553 = vmatpush.msra.mxu0 %v1522
    %1554 = vmatpush.msra.mxu0 %v1521
    %1555 = vmatpush.msra.mxu0 %v1520
    %1556 = vmatmul.f32.gmra.mxu0 %v1519
    %v1557 = vpop.f32.mrf.mxu0
    %v1558 = vadd.f32 %v1538, %v1557
    %1559 = vdwg.mxu0
    %v1560 = vmax.f32 %v1558, 0.0
    %v1561 = vld [vmem:[%s6] sm:$0xff]
    %v1562 = vld [vmem:[%s6 + $0x8] sm:$0xff]
    %v1563 = vld [vmem:[%s6 + $0x10] sm:$0xff]
    %v1564 = vld [vmem:[%s6 + $0x18] sm:$0xff]
    %v1565 = vld [vmem:[%s7] sm:$0x1]
    %v1567 = vperm.slane %v1565, 0
    %vm1569 = vcmask 261120
    %v1571 = vsel %vm1569, %v1560, 0
    %1573 = vmatpush.msra.mxu0 0.0
    %1574 = vmatpush.msra.mxu0 0.0
    %1575 = vmatpush.msra.mxu0 0.0
    %1576 = vmatpush.msra.mxu0 0.0
    %1577 = vmatpush.msra.mxu0 0.0
    %1578 = vmatpush.msra.mxu0 0.0
    %1579 = vmatpush.msra.mxu0 0.0
    %1580 = vmatpush.msra.mxu0 0.0
    %1581 = vmatpush.msra.mxu0 0.0
    %1582 = vmatpush.msra.mxu0 0.0
    %1583 = vmatpush.msra.mxu0 0.0
    %1584 = vmatpush.msra.mxu0 0.0
    %1585 = vmatpush.msra.mxu0 %v1564
    %1586 = vmatpush.msra.mxu0 %v1563
    %1587 = vmatpush.msra.mxu0 %v1562
    %1588 = vmatpush.msra.mxu0 %v1561
    %1589 = vmatmul.f32.gmra.mxu0 %v1571
    %v1590 = vpop.f32.mrf.mxu0
    %v1591 = vadd.f32 %v1567, %v1590
    %1592 = vdwg.mxu0
    %v1593 = vmax.f32 %v1591, 0.0
    %v1594 = vld [vmem:[%s8] sm:$0xff]
    %v1595 = vld [vmem:[%s8 + $0x8] sm:$0xff]
    %v1596 = vld [vmem:[%s8 + $0x10] sm:$0xff]
    %v1597 = vld [vmem:[%s8 + $0x18] sm:$0xff]
    %v1598 = vld [vmem:[%s8 + $0x20] sm:$0xff]
    %v1599 = vld [vmem:[%s8 + $0x28] sm:$0xff]
    %v1600 = vld [vmem:[%s8 + $0x30] sm:$0xff]
    %v1601 = vld [vmem:[%s8 + $0x38] sm:$0xff]
    %v1602 = vld [vmem:[%s9] sm:$0x1]
    %v1604 = vperm.slane %v1602, 0
    %vm1606 = vcmask 523264
    %v1608 = vsel %vm1606, %v1593, 0
    %1610 = vmatpush.msra.mxu0 0.0
    %1611 = vmatpush.msra.mxu0 0.0
    %1612 = vmatpush.msra.mxu0 0.0
    %1613 = vmatpush.msra.mxu0 0.0
    %1614 = vmatpush.msra.mxu0 0.0
    %1615 = vmatpush.msra.mxu0 0.0
    %1616 = vmatpush.msra.mxu0 0.0
    %1617 = vmatpush.msra.mxu0 0.0
    %1618 = vmatpush.msra.mxu0 %v1601
    %1619 = vmatpush.msra.mxu0 %v1600
    %1620 = vmatpush.msra.mxu0 %v1599
    %1621 = vmatpush.msra.mxu0 %v1598
    %1622 = vmatpush.msra.mxu0 %v1597
    %1623 = vmatpush.msra.mxu0 %v1596
    %1624 = vmatpush.msra.mxu0 %v1595
    %1625 = vmatpush.msra.mxu0 %v1594
    %1626 = vmatmul.f32.gmra.mxu0 %v1608
    %v1627 = vpop.f32.mrf.mxu0
    %v1628 = vadd.f32 %v1604, %v1627
    %1629 = vdwg.mxu0
    %v1630 = vtanh.pop %v1628
    %v1631 = vmul.f32 %v1630, 2.0
    %vm1632 = vcmask 39936
    %1633 = vst.msk [vmem:[#allocation5] sm:$0xff] %vm1632, %v1631
    // Predicated region
    $region46: #{tpu_custom_call.1} parent=1 // pred_check
      _
    $region47: #{tpu_custom_call.1} parent=1 // pred_check_branch
      %1635 = sbr.rel (0) target = $region49
    $region48: #{tpu_custom_call.1} parent=1 // pred_region
      %1637 = vsyncadd [#allocation4], 0
      %s1639 = sshll.u32 [#allocation5], 4
      %s1640 = int_to_ptr.vmem [resolvable:$true] %s1639
      %s1641 = sshll.u32 %s10, 4
      %s1642 = int_to_ptr.hbm [resolvable:$true] %s1641
      %1644 = dma.vmem_to_hbm [thread:$0]  %s1640, 128, %s1642, [#allocation4]
    $region49: #{tpu_custom_call.1} parent=1 // pred_fallthru
      _
    // Predicated region
    $region50: #{tpu_custom_call.1} parent=1 // pred_check
      _
    $region51: #{tpu_custom_call.1} parent=1 // pred_check_branch
      %1646 = sbr.rel (0) target = $region53
    $region52: #{tpu_custom_call.1} parent=1 // pred_region
      %1648 = dma.done [#allocation4], 128
    $region53: #{tpu_custom_call.1} parent=1 // pred_fallthru
      _
    %1649 = vsyncpa [#allocation3], 1
    %1650 = vsyncpa [#allocation4], 1

</llo_original>
